<compile_context>
chip_gen: v7x
topology: tpu7x:2x2x1
jax: 0.10.0
libtpu: 0.0.40
codegen_flags: <defaults>
</compile_context>

<pallas_src>
import numpy as np
import jax
import jax.numpy as jnp
from jax.experimental import pallas as pl
from jax.experimental.pallas import tpu as pltpu

# ------------------------- module hyper-parameters -------------------------
N_AGENTS = 8
UNIT_DIM = 4
STATE_DIM = 32                     # >= UNIT_DIM * N_AGENTS
N_ACTIONS = 6                      # unused in forward (nonlinear == False)
N_HEADS = 4
EMBED_DIM = 32
HYPERNET_EMBED = 64
ATTEND_REG_COEF = 0.001
WEIGHTED_HEAD = True               # nonlinear is hard-coded False in the module

FUSED1 = N_HEADS * HYPERNET_EMBED + HYPERNET_EMBED        # 320 fused hidden
REP_ROWS = N_HEADS * N_AGENTS * UNIT_DIM                  # 128 (h*32 + a*4 + d)
HW_ROWS = N_HEADS * N_AGENTS                              # 32  (h*8 + a)
FUSED2 = REP_ROWS + HW_ROWS                               # 160 fused layer-2 out
OUT_ROWS = N_AGENTS + 2 * N_HEADS                         # 16  [attend|sq|ent]
TAIL_COLS = 3 * HW_ROWS                                   # 96  fused tail LHS


# ---------------------- constant lane-algebra matrices -----------------------
def _build_consts():
    A, D, H, E = N_AGENTS, UNIT_DIM, N_HEADS, EMBED_DIM
    inv = np.float32(1.0 / np.sqrt(E))

    # scaled[h*8+a] = (1/sqrt(E)) * sum_d prod[h*32 + a*4 + d]
    l2T = np.zeros((HW_ROWS, REP_ROWS), np.float32)
    for h in range(H):
        for a in range(A):
            for d in range(D):
                l2T[h * A + a, h * A * D + a * D + d] = inv

    # per-head softmax denominator replicated to agent rows (block of ones)
    onesT = np.zeros((HW_ROWS, HW_ROWS), np.float32)
    for h in range(H):
        onesT[h * A:(h + 1) * A, h * A:(h + 1) * A] = 1.0

    # fused tail reduction: [attend(8) ; sum(logits^2)(4) ; entropy(4)]
    #   LHS columns blocks: [probs*w_head | scaled^2 | -log(probs+1e-8)*probs]
    tailT = np.zeros((OUT_ROWS, TAIL_COLS), np.float32)
    for h in range(H):
        for a in range(A):
            tailT[a, h * A + a] = 1.0                           # sum over heads
            tailT[A + h, HW_ROWS + h * A + a] = np.float32(E)   # un-scale logits^2
            tailT[A + H + h, 2 * HW_ROWS + h * A + a] = 1.0     # sum over agents
    return l2T, onesT, tailT


_L2T_NP, _ONEST_NP, _TAILT_NP = _build_consts()


# ------------------------- fused weight construction -------------------------
def build_qatten_constants(params):
    """Build all fused (transposed) weights + constants ONCE per parameter set."""
    w1, b1, w2, wk = params["w1"], params["b1"], params["w2"], params["wk"]
    wh1, bh1, wh2, bh2 = params["wh1"], params["bh1"], params["wh2"], params["bh2"]

    # layer 1: [w1_0 | w1_1 | w1_2 | w1_3 | wh1] -> transposed (320, 32)
    wf1 = jnp.concatenate([w1[h] for h in range(N_HEADS)] + [wh1], axis=1)
    bf1 = jnp.concatenate([b1[h] for h in range(N_HEADS)] + [bh1], axis=1)
    wf1T = wf1.T                                             # (320, 32)
    bf1T = bf1.T                                             # (320, 1)

    # layer 2 (block diagonal), with the key projection AND per-agent expand
    # folded in:  block_h = tile(w2[h] @ wk[h]^T, agents)    (64, 32)
    w2wk = jnp.einsum("hke,hde->hkd", w2, wk,
                      precision=jax.lax.Precision.HIGHEST)   # (H, 64, 4)
    w2f = jnp.zeros((FUSED1, FUSED2), jnp.float32)           # (320, 160)
    for h in range(N_HEADS):
        w2f = w2f.at[h * HYPERNET_EMBED:(h + 1) * HYPERNET_EMBED,
                     h * N_AGENTS * UNIT_DIM:(h + 1) * N_AGENTS * UNIT_DIM].set(
            jnp.tile(w2wk[h], (1, N_AGENTS)))
    # hyper_w_head layer 2, columns pre-replicated per agent (layout h*8+a)
    w2f = w2f.at[N_HEADS * HYPERNET_EMBED:, REP_ROWS:].set(
        jnp.repeat(wh2, N_AGENTS, axis=1))
    w2fT = w2f.T                                             # (160, 320)
    bh2rT = jnp.repeat(bh2.reshape(N_HEADS, 1), N_AGENTS, axis=0)  # (32, 1)

    return dict(wf1T=wf1T, bf1T=bf1T, w2fT=w2fT, bh2rT=bh2rT,
                l2T=jnp.asarray(_L2T_NP), onesT=jnp.asarray(_ONEST_NP),
                tailT=jnp.asarray(_TAILT_NP))


# --------------------------------- kernel ----------------------------------
def qatten_kernel(st_ref, wf1T_ref, bf1T_ref, w2fT_ref, bh2rT_ref,
                  l2T_ref, onesT_ref, tailT_ref, out_ref):
    st = st_ref[...]                                         # (32, TB) batch on lanes

    # Fused first layer: 4 query extractors + hyper_w_head layer 1.
    h1 = jnp.maximum(
        jnp.dot(wf1T_ref[...], st, preferred_element_type=jnp.float32)
        + bf1T_ref[...], 0.0)                                # (320, TB)

    # Fused second layer: key projection + per-agent expand folded in.
    #   rows [0,128)   : r replicated per agent, layout h*32 + a*4 + d
    #   rows [128,160) : head-weight logits, layout h*8 + a
    out2 = jnp.dot(w2fT_ref[...], h1, preferred_element_type=jnp.float32)  # (160, TB)
    r_rep = out2[:REP_ROWS]                                  # (128, TB)
    w_head = jnp.abs(out2[REP_ROWS:] + bh2rT_ref[...])       # (32, TB)

    # Scaled attention logits (1/sqrt(E) folded into l2T), layout h*8 + a:
    #   scaled[h*8+a, b] = (1/sqrt(E)) * sum_d u[b,a,d] * r[b,h,d]
    st_u = st[:N_AGENTS * UNIT_DIM]                          # (32, TB)
    s_rep = jnp.concatenate([st_u] * N_HEADS, axis=0)        # (128, TB)
    scaled = jnp.dot(l2T_ref[...], s_rep * r_rep,
                     preferred_element_type=jnp.float32)     # (32, TB)

    # Per-head softmax over agents.  Subtracting the per-column global max is a
    # valid per-segment shift (softmax is shift invariant), keeps exp args <= 0.
    m = jnp.max(scaled, axis=0, keepdims=True)               # (1, TB)
    e = jnp.exp(scaled - m)
    denom = jnp.dot(onesT_ref[...], e,
                    preferred_element_type=jnp.float32)      # (32, TB)
    inv = pl.reciprocal(denom, approx=True)                  # EUP slot
    inv = inv * (2.0 - denom * inv)                          # one Newton step (VPU)
    probs = e * inv

    # Fused tail reduction -> output tile [attend(8) ; sum(logits^2)(4) ; ent(4)].
    tail_lhs = jnp.concatenate(
        [probs * w_head, scaled * scaled, -jnp.log(probs + 1e-8) * probs],
        axis=0)                                              # (96, TB)
    out_ref[...] = jnp.dot(tailT_ref[...], tail_lhs,
                           preferred_element_type=jnp.float32)  # (16, TB)


# --------------------------------- wrapper ----------------------------------
def _pick_lane_blocks(n_blk):
    """Blocks-of-128-lanes per tile: keep grid >= 2 when possible (v7x
    megacore) and grow the tile (up to 512 lanes) to amortize per-step
    pipeline overhead, without adding extra padding."""
    for cand in (4, 3, 2):
        if n_blk % cand == 0 and n_blk // cand >= 2:
            return cand
    return 1


def qatten_weight_forward(agent_qs, states, fused):
    """Mirrors Qatten_Weight.forward (nonlinear=False, weighted_head=True).

    agent_qs only affects the module when nonlinear=True, so (like the PyTorch
    forward) it does not influence the result here.
    """
    del agent_qs
    states2 = states.reshape(-1, STATE_DIM).astype(jnp.float32)
    B = states2.shape[0]

    # Lane-major layout: batch on lanes, padded to a multiple of 128.
    n_blk = max(1, (B + 127) // 128)
    bpt = _pick_lane_blocks(n_blk)
    TB = 128 * bpt
    Bp = n_blk * 128

    statesT = states2.T                                      # (32, B)
    if Bp != B:
        statesT = jnp.pad(statesT, ((0, 0), (0, Bp - B)))

    const = lambda i: (0, 0)

    out = pl.pallas_call(
        qatten_kernel,
        out_shape=jax.ShapeDtypeStruct((OUT_ROWS, Bp), jnp.float32),
        grid_spec=pltpu.PrefetchScalarGridSpec(
            num_scalar_prefetch=0,
            grid=(Bp // TB,),
            in_specs=[
                pl.BlockSpec((STATE_DIM, TB), lambda i: (0, i)),
                pl.BlockSpec((FUSED1, STATE_DIM), const),
                pl.BlockSpec((FUSED1, 1), const),
                pl.BlockSpec((FUSED2, FUSED1), const),
                pl.BlockSpec((HW_ROWS, 1), const),
                pl.BlockSpec((HW_ROWS, REP_ROWS), const),
                pl.BlockSpec((HW_ROWS, HW_ROWS), const),
                pl.BlockSpec((OUT_ROWS, TAIL_COLS), const),
            ],
            out_specs=pl.BlockSpec((OUT_ROWS, TB), lambda i: (0, i)),
        ),
        compiler_params=pltpu.CompilerParams(
            dimension_semantics=("parallel",)),
    )(statesT, fused["wf1T"], fused["bf1T"], fused["w2fT"], fused["bh2rT"],
      fused["l2T"], fused["onesT"], fused["tailT"])

    out = out[:, :B]                                         # drop padded columns
    attend = out[:N_AGENTS].T                                # (B, A)
    sq_sum = jnp.sum(out[N_AGENTS:N_AGENTS + N_HEADS], axis=1)          # (H,)
    attend_mag_regs = ATTEND_REG_COEF * jnp.sum(sq_sum) / (B * N_AGENTS)
    head_entropies = [jnp.mean(out[N_AGENTS + N_HEADS + h])
                      for h in range(N_HEADS)]
    return attend, attend_mag_regs, head_entropies


# ------------------------- pure-JAX reference (check) ------------------------
def qatten_reference(states, params):
    states2 = states.reshape(-1, STATE_DIM).astype(jnp.float32)
    B = states2.shape[0]
    unit_states = states2[:, :UNIT_DIM * N_AGENTS].reshape(B, N_AGENTS, UNIT_DIM)

    w_head = jnp.abs(
        jnp.maximum(states2 @ params["wh1"] + params["bh1"], 0.0)
        @ params["wh2"] + params["bh2"])                          # (B, H)

    head_attend = jnp.zeros((B, N_AGENTS), jnp.float32)
    sq_means, ents = [], []
    for h in range(N_HEADS):
        q = jnp.maximum(states2 @ params["w1"][h] + params["b1"][h, 0], 0.0) \
            @ params["w2"][h]                                     # (B, E)
        keys = jnp.einsum("bad,de->bae", unit_states, params["wk"][h])
        logits = jnp.einsum("be,bae->ba", q, keys)                # (B, A)
        probs = jax.nn.softmax(logits / np.sqrt(EMBED_DIM), axis=-1)
        head_attend = head_attend + probs * w_head[:, h:h + 1]
        sq_means.append(jnp.mean(logits ** 2))
        ents.append(jnp.mean(jnp.sum(-jnp.log(probs + 1e-8) * probs, axis=-1)))
    reg = ATTEND_REG_COEF * sum(sq_means)
    return head_attend, reg, ents


# ------------------------------------ main -----------------------------------
if __name__ == "__main__":
    key = jax.random.PRNGKey(0)
    ks = jax.random.split(key, 12)

    params = {
        "w1":  0.1 * jax.random.normal(ks[0], (N_HEADS, STATE_DIM, HYPERNET_EMBED), jnp.float32),
        "b1":  0.1 * jax.random.normal(ks[1], (N_HEADS, 1, HYPERNET_EMBED), jnp.float32),
        "w2":  0.1 * jax.random.normal(ks[2], (N_HEADS, HYPERNET_EMBED, EMBED_DIM), jnp.float32),
        "wk":  0.1 * jax.random.normal(ks[3], (N_HEADS, UNIT_DIM, EMBED_DIM), jnp.float32),
        "wh1": 0.1 * jax.random.normal(ks[4], (STATE_DIM, HYPERNET_EMBED), jnp.float32),
        "bh1": 0.1 * jax.random.normal(ks[5], (1, HYPERNET_EMBED), jnp.float32),
        "wh2": 0.1 * jax.random.normal(ks[6], (HYPERNET_EMBED, N_HEADS), jnp.float32),
        "bh2": 0.1 * jax.random.normal(ks[7], (1, N_HEADS), jnp.float32),
    }

    batch, seq = 2, 8                                   # B = 16 flattened samples
    states = jax.random.normal(ks[8], (batch, seq, STATE_DIM), jnp.float32)
    agent_qs = jax.random.normal(ks[9], (batch, seq, N_AGENTS), jnp.float32)

    # Build fused weights / constants ONCE (cached across forward calls).
    fused = build_qatten_constants(params)
    fused = jax.tree_util.tree_map(jax.block_until_ready, fused)

    head_attend, reg, entropies = qatten_weight_forward(agent_qs, states, fused)
    jax.block_until_ready(head_attend)
    jax.block_until_ready(reg)
    for e in entropies:
        jax.block_until_ready(e)

    # correctness check against pure-JAX reference
    ref_attend, ref_reg, ref_ents = qatten_reference(states, params)
    assert jnp.allclose(head_attend, ref_attend, atol=1e-4), "head_attend mismatch"
    assert jnp.allclose(reg, ref_reg, atol=1e-6), "attend_mag_regs mismatch"
    for e, re in zip(entropies, ref_ents):
        assert jnp.allclose(e, re, atol=1e-4), "entropy mismatch"

    # TODO(synk): the nonlinear=True branch (agent_qs concatenated into the keys)
    # is not implemented; the module hard-codes nonlinear=False.
    print("KERNEL_OK")
</pallas_src>

<mosaic_0001>
module attributes {stable_mosaic.version = 11 : i64} {
  func.func @qatten_kernel(%arg0: i32, %arg1: memref<32x128xf32, #tpu.memory_space<vmem>>, %arg2: memref<320x32xf32, #tpu.memory_space<vmem>>, %arg3: memref<320x1xf32, #tpu.memory_space<vmem>>, %arg4: memref<160x320xf32, #tpu.memory_space<vmem>>, %arg5: memref<32x1xf32, #tpu.memory_space<vmem>>, %arg6: memref<32x128xf32, #tpu.memory_space<vmem>>, %arg7: memref<32x32xf32, #tpu.memory_space<vmem>>, %arg8: memref<16x96xf32, #tpu.memory_space<vmem>>, %arg9: memref<16x128xf32, #tpu.memory_space<vmem>>) attributes {dimension_semantics = [#tpu.dimension_semantics<parallel>], iteration_bounds = array<i64: 1>, scalar_prefetch = 0 : i64, scratch_operands = 0 : i64, tpu.core_type = #tpu.core_type<tc>, window_params = [{transform_indices = @transform_0, window_bounds = array<i64: 32, 128>}, {pipeline_mode = #tpu.pipeline_mode<synchronous>, transform_indices = @transform_1, window_bounds = array<i64: 320, 32>}, {pipeline_mode = #tpu.pipeline_mode<synchronous>, transform_indices = @transform_2, window_bounds = array<i64: 320, 1>}, {pipeline_mode = #tpu.pipeline_mode<synchronous>, transform_indices = @transform_3, window_bounds = array<i64: 160, 320>}, {pipeline_mode = #tpu.pipeline_mode<synchronous>, transform_indices = @transform_4, window_bounds = array<i64: 32, 1>}, {pipeline_mode = #tpu.pipeline_mode<synchronous>, transform_indices = @transform_5, window_bounds = array<i64: 32, 128>}, {pipeline_mode = #tpu.pipeline_mode<synchronous>, transform_indices = @transform_6, window_bounds = array<i64: 32, 32>}, {pipeline_mode = #tpu.pipeline_mode<synchronous>, transform_indices = @transform_7, window_bounds = array<i64: 16, 96>}, {transform_indices = @transform_8, window_bounds = array<i64: 16, 128>}]} {
    %c0 = arith.constant 0 : index
    %c0_0 = arith.constant 0 : index
    %0 = vector.load %arg1[%c0, %c0_0] : memref<32x128xf32, #tpu.memory_space<vmem>>, vector<32x128xf32>
    %c0_1 = arith.constant 0 : index
    %c0_2 = arith.constant 0 : index
    %1 = vector.load %arg2[%c0_1, %c0_2] : memref<320x32xf32, #tpu.memory_space<vmem>>, vector<320x32xf32>
    %cst = arith.constant dense<0.000000e+00> : vector<320x128xf32>
    %2 = tpu.matmul %1, %0, %cst {dimension_numbers = #tpu.dot_dimension_numbers<[1], [0], [0], [1], [0, 0, 1, 1], [], []>} : vector<320x32xf32>, vector<32x128xf32>, vector<320x128xf32> -> vector<320x128xf32>
    %c0_3 = arith.constant 0 : index
    %c0_4 = arith.constant 0 : index
    %3 = vector.load %arg3[%c0_3, %c0_4] : memref<320x1xf32, #tpu.memory_space<vmem>>, vector<320x1xf32>
    %4 = vector.broadcast %3 : vector<320x1xf32> to vector<320x128xf32>
    %5 = arith.addf %2, %4 : vector<320x128xf32>
    %cst_5 = arith.constant 0.000000e+00 : f32
    %6 = vector.broadcast %cst_5 : f32 to vector<320x128xf32>
    %7 = arith.maximumf %5, %6 : vector<320x128xf32>
    %c0_6 = arith.constant 0 : index
    %c0_7 = arith.constant 0 : index
    %8 = vector.load %arg4[%c0_6, %c0_7] : memref<160x320xf32, #tpu.memory_space<vmem>>, vector<160x320xf32>
    %cst_8 = arith.constant dense<0.000000e+00> : vector<160x128xf32>
    %9 = tpu.matmul %8, %7, %cst_8 {dimension_numbers = #tpu.dot_dimension_numbers<[1], [0], [0], [1], [0, 0, 1, 1], [], []>} : vector<160x320xf32>, vector<320x128xf32>, vector<160x128xf32> -> vector<160x128xf32>
    %10 = vector.extract_strided_slice %9 {offsets = [0, 0], sizes = [128, 128], strides = [1, 1]} : vector<160x128xf32> to vector<128x128xf32>
    %11 = vector.extract_strided_slice %9 {offsets = [128, 0], sizes = [32, 128], strides = [1, 1]} : vector<160x128xf32> to vector<32x128xf32>
    %c0_9 = arith.constant 0 : index
    %c0_10 = arith.constant 0 : index
    %12 = vector.load %arg5[%c0_9, %c0_10] : memref<32x1xf32, #tpu.memory_space<vmem>>, vector<32x1xf32>
    %13 = vector.broadcast %12 : vector<32x1xf32> to vector<32x128xf32>
    %14 = arith.addf %11, %13 : vector<32x128xf32>
    %15 = math.absf %14 : vector<32x128xf32>
    %16 = tpu.concatenate %0, %0, %0, %0 in 0 : vector<32x128xf32>, vector<32x128xf32>, vector<32x128xf32>, vector<32x128xf32> -> vector<128x128xf32>
    %c0_11 = arith.constant 0 : index
    %c0_12 = arith.constant 0 : index
    %17 = vector.load %arg6[%c0_11, %c0_12] : memref<32x128xf32, #tpu.memory_space<vmem>>, vector<32x128xf32>
    %18 = arith.mulf %16, %10 : vector<128x128xf32>
    %cst_13 = arith.constant dense<0.000000e+00> : vector<32x128xf32>
    %19 = tpu.matmul %17, %18, %cst_13 {dimension_numbers = #tpu.dot_dimension_numbers<[1], [0], [0], [1], [0, 0, 1, 1], [], []>} : vector<32x128xf32>, vector<128x128xf32>, vector<32x128xf32> -> vector<32x128xf32>
    %cst_14 = arith.constant dense<0xFF800000> : vector<128xf32>
    %20 = vector.multi_reduction <maximumf>, %19, %cst_14 [0] : vector<32x128xf32> to vector<128xf32>
    %21 = vector.shape_cast %20 : vector<128xf32> to vector<1x128xf32>
    %22 = vector.broadcast %21 : vector<1x128xf32> to vector<32x128xf32>
    %23 = arith.subf %19, %22 : vector<32x128xf32>
    %24 = math.exp %23 : vector<32x128xf32>
    %c0_15 = arith.constant 0 : index
    %c0_16 = arith.constant 0 : index
    %25 = vector.load %arg7[%c0_15, %c0_16] : memref<32x32xf32, #tpu.memory_space<vmem>>, vector<32x32xf32>
    %cst_17 = arith.constant dense<0.000000e+00> : vector<32x128xf32>
    %26 = tpu.matmul %25, %24, %cst_17 {dimension_numbers = #tpu.dot_dimension_numbers<[1], [0], [0], [1], [0, 0, 1, 1], [], []>} : vector<32x32xf32>, vector<32x128xf32>, vector<32x128xf32> -> vector<32x128xf32>
    %27 = tpu.reciprocal %26 {approx = true} : vector<32x128xf32> -> vector<32x128xf32>
    %28 = arith.mulf %26, %27 : vector<32x128xf32>
    %cst_18 = arith.constant 2.000000e+00 : f32
    %29 = vector.broadcast %cst_18 : f32 to vector<32x128xf32>
    %30 = arith.subf %29, %28 : vector<32x128xf32>
    %31 = arith.mulf %27, %30 : vector<32x128xf32>
    %32 = arith.mulf %24, %31 : vector<32x128xf32>
    %33 = arith.mulf %32, %15 : vector<32x128xf32>
    %34 = arith.mulf %19, %19 : vector<32x128xf32>
    %cst_19 = arith.constant 9.99999993E-9 : f32
    %35 = vector.broadcast %cst_19 : f32 to vector<32x128xf32>
    %36 = arith.addf %32, %35 : vector<32x128xf32>
    %37 = math.log %36 : vector<32x128xf32>
    %cst_20 = arith.constant 0.000000e+00 : f32
    %38 = vector.broadcast %cst_20 : f32 to vector<32x128xf32>
    %39 = arith.subf %38, %37 : vector<32x128xf32>
    %40 = arith.mulf %39, %32 : vector<32x128xf32>
    %41 = tpu.concatenate %33, %34, %40 in 0 : vector<32x128xf32>, vector<32x128xf32>, vector<32x128xf32> -> vector<96x128xf32>
    %c0_21 = arith.constant 0 : index
    %c0_22 = arith.constant 0 : index
    %42 = vector.load %arg8[%c0_21, %c0_22] : memref<16x96xf32, #tpu.memory_space<vmem>>, vector<16x96xf32>
    %cst_23 = arith.constant dense<0.000000e+00> : vector<16x128xf32>
    %43 = tpu.matmul %42, %41, %cst_23 {dimension_numbers = #tpu.dot_dimension_numbers<[1], [0], [0], [1], [0, 0, 1, 1], [], []>} : vector<16x96xf32>, vector<96x128xf32>, vector<16x128xf32> -> vector<16x128xf32>
    %c0_24 = arith.constant 0 : index
    %c0_25 = arith.constant 0 : index
    %44 = vector.load %arg9[%c0_24, %c0_25] : memref<16x128xf32, #tpu.memory_space<vmem>>, vector<16x128xf32>
    tpu.vector_store %arg9[%c0_24, %c0_25], %43 {strides = array<i32>} : memref<16x128xf32, #tpu.memory_space<vmem>>, vector<16x128xf32>,
    return
  }
  func.func @transform_0(%arg0: i32) -> (i32, i32) {
    %c0_i32 = arith.constant 0 : i32
    %c0_i32_0 = arith.constant 0 : i32
    return %c0_i32, %arg0 : i32, i32
  }
  func.func @transform_1(%arg0: i32) -> (i32, i32) {
    %c0_i32 = arith.constant 0 : i32
    %c0_i32_0 = arith.constant 0 : i32
    %c0_i32_1 = arith.constant 0 : i32
    return %c0_i32, %c0_i32_0 : i32, i32
  }
  func.func @transform_2(%arg0: i32) -> (i32, i32) {
    %c0_i32 = arith.constant 0 : i32
    %c0_i32_0 = arith.constant 0 : i32
    %c0_i32_1 = arith.constant 0 : i32
    return %c0_i32, %c0_i32_0 : i32, i32
  }
  func.func @transform_3(%arg0: i32) -> (i32, i32) {
    %c0_i32 = arith.constant 0 : i32
    %c0_i32_0 = arith.constant 0 : i32
    %c0_i32_1 = arith.constant 0 : i32
    return %c0_i32, %c0_i32_0 : i32, i32
  }
  func.func @transform_4(%arg0: i32) -> (i32, i32) {
    %c0_i32 = arith.constant 0 : i32
    %c0_i32_0 = arith.constant 0 : i32
    %c0_i32_1 = arith.constant 0 : i32
    return %c0_i32, %c0_i32_0 : i32, i32
  }
  func.func @transform_5(%arg0: i32) -> (i32, i32) {
    %c0_i32 = arith.constant 0 : i32
    %c0_i32_0 = arith.constant 0 : i32
    %c0_i32_1 = arith.constant 0 : i32
    return %c0_i32, %c0_i32_0 : i32, i32
  }
  func.func @transform_6(%arg0: i32) -> (i32, i32) {
    %c0_i32 = arith.constant 0 : i32
    %c0_i32_0 = arith.constant 0 : i32
    %c0_i32_1 = arith.constant 0 : i32
    return %c0_i32, %c0_i32_0 : i32, i32
  }
  func.func @transform_7(%arg0: i32) -> (i32, i32) {
    %c0_i32 = arith.constant 0 : i32
    %c0_i32_0 = arith.constant 0 : i32
    %c0_i32_1 = arith.constant 0 : i32
    return %c0_i32, %c0_i32_0 : i32, i32
  }
  func.func @transform_8(%arg0: i32) -> (i32, i32) {
    %c0_i32 = arith.constant 0 : i32
    %c0_i32_0 = arith.constant 0 : i32
    return %c0_i32, %arg0 : i32, i32
  }
}

</mosaic_0001>

<llo_original>
// kernel: tpu_custom_call.1
$region0: #{tpu_custom_call.1}
  #allocation0 [shape = 'u32[]', space=smem, size = 0x4, offset = 0x4, fixed_abs, tag = 'smem constant byte address 0x4 - core index']
  #allocation1 [shape = 'u32[144,128]{1,0:T(1,128)}', space=vmem, size = 0x12000, scoped, tag = 'internal scratch']
  %s0 = inlined_call_operand.vmem [shape: f32[32,128], index: 0, kind: input, shape index: {}]
  %s1 = inlined_call_operand.vmem [shape: f32[320,32], index: 1, kind: input, shape index: {}]
  %s2 = inlined_call_operand.vmem [shape: f32[320,1], index: 2, kind: input, shape index: {}]
  %s3 = inlined_call_operand.vmem [shape: f32[160,320], index: 3, kind: input, shape index: {}]
  %s4 = inlined_call_operand.vmem [shape: f32[32,1], index: 4, kind: input, shape index: {}]
  %s5 = inlined_call_operand.vmem [shape: f32[32,128], index: 5, kind: input, shape index: {}]
  %s6 = inlined_call_operand.vmem [shape: f32[32,32], index: 6, kind: input, shape index: {}]
  %s7 = inlined_call_operand.vmem [shape: f32[16,96], index: 7, kind: input, shape index: {}]
  %s8 = inlined_call_operand.hbm [shape: f32[16,128], index: 8, kind: output, shape index: {}]
  %s9 = sld [smem:[#allocation0]]
  $region42: #{tpu_custom_call.1} parent=0
    _
  %s11 = ssub.s32 1, %s9
  %s12 = scalar_select 0, %s11, %s9
  $region1: #{tpu_custom_call.1} parent=0
    #allocation2 [shape = 'u8[8192]{0}', space=vmem, size = 0x2000, scoped, tag = 'output window, operand 0, single buffered']
    #allocation3 [shape = 's32[1]{0}', space=sflag, size = 0x4, scoped, tag = 'scoped memory for tpu_custom_call.1']
    %13 = vsyncpa [#allocation3], 0
    // Predicated region
    $region2: #{tpu_custom_call.1} parent=1 // pred_check
      _
    $region3: #{tpu_custom_call.1} parent=1 // pred_check_branch
      %15 = sbr.rel (0) target = $region5
    $region4: #{tpu_custom_call.1} parent=1 // pred_region
      _
    $region5: #{tpu_custom_call.1} parent=1 // pred_fallthru
      _
    // Predicated region
    $region6: #{tpu_custom_call.1} parent=1 // pred_check
      _
    $region7: #{tpu_custom_call.1} parent=1 // pred_check_branch
      %17 = sbr.rel (0) target = $region9
    $region8: #{tpu_custom_call.1} parent=1 // pred_region
      _
    $region9: #{tpu_custom_call.1} parent=1 // pred_fallthru
      _
    // Predicated region
    $region10: #{tpu_custom_call.1} parent=1 // pred_check
      _
    $region11: #{tpu_custom_call.1} parent=1 // pred_check_branch
      %19 = sbr.rel (0) target = $region13
    $region12: #{tpu_custom_call.1} parent=1 // pred_region
      _
    $region13: #{tpu_custom_call.1} parent=1 // pred_fallthru
      _
    // Predicated region
    $region14: #{tpu_custom_call.1} parent=1 // pred_check
      _
    $region15: #{tpu_custom_call.1} parent=1 // pred_check_branch
      %21 = sbr.rel (0) target = $region17
    $region16: #{tpu_custom_call.1} parent=1 // pred_region
      _
    $region17: #{tpu_custom_call.1} parent=1 // pred_fallthru
      _
    // Predicated region
    $region18: #{tpu_custom_call.1} parent=1 // pred_check
      _
    $region19: #{tpu_custom_call.1} parent=1 // pred_check_branch
      %23 = sbr.rel (0) target = $region21
    $region20: #{tpu_custom_call.1} parent=1 // pred_region
      _
    $region21: #{tpu_custom_call.1} parent=1 // pred_fallthru
      _
    // Predicated region
    $region22: #{tpu_custom_call.1} parent=1 // pred_check
      _
    $region23: #{tpu_custom_call.1} parent=1 // pred_check_branch
      %25 = sbr.rel (0) target = $region25
    $region24: #{tpu_custom_call.1} parent=1 // pred_region
      _
    $region25: #{tpu_custom_call.1} parent=1 // pred_fallthru
      _
    // Predicated region
    $region26: #{tpu_custom_call.1} parent=1 // pred_check
      _
    $region27: #{tpu_custom_call.1} parent=1 // pred_check_branch
      %27 = sbr.rel (0) target = $region29
    $region28: #{tpu_custom_call.1} parent=1 // pred_region
      _
    $region29: #{tpu_custom_call.1} parent=1 // pred_fallthru
      _
    // Predicated region
    $region30: #{tpu_custom_call.1} parent=1 // pred_check
      _
    $region31: #{tpu_custom_call.1} parent=1 // pred_check_branch
      %29 = sbr.rel (0) target = $region33
    $region32: #{tpu_custom_call.1} parent=1 // pred_region
      _
    $region33: #{tpu_custom_call.1} parent=1 // pred_fallthru
      _
    %v30 = vld [vmem:[%s0] sm:$0xff]
    %v31 = vld [vmem:[%s0 + $0x8] sm:$0xff]
    %v32 = vld [vmem:[%s0 + $0x10] sm:$0xff]
    %v33 = vld [vmem:[%s0 + $0x18] sm:$0xff]
    %v34 = vld [vmem:[%s1] sm:$0xff]
    %v35 = vld [vmem:[%s1 + $0x8] sm:$0xff]
    %v36 = vld [vmem:[%s1 + $0x10] sm:$0xff]
    %v37 = vld [vmem:[%s1 + $0x18] sm:$0xff]
    %v38 = vld [vmem:[%s1 + $0x20] sm:$0xff]
    %v39 = vld [vmem:[%s1 + $0x28] sm:$0xff]
    %v40 = vld [vmem:[%s1 + $0x30] sm:$0xff]
    %v41 = vld [vmem:[%s1 + $0x38] sm:$0xff]
    %v42 = vld [vmem:[%s1 + $0x40] sm:$0xff]
    %v43 = vld [vmem:[%s1 + $0x48] sm:$0xff]
    %v44 = vld [vmem:[%s1 + $0x50] sm:$0xff]
    %v45 = vld [vmem:[%s1 + $0x58] sm:$0xff]
    %v46 = vld [vmem:[%s1 + $0x60] sm:$0xff]
    %v47 = vld [vmem:[%s1 + $0x68] sm:$0xff]
    %v48 = vld [vmem:[%s1 + $0x70] sm:$0xff]
    %v49 = vld [vmem:[%s1 + $0x78] sm:$0xff]
    %v50 = vld [vmem:[%s1 + $0x80] sm:$0xff]
    %v51 = vld [vmem:[%s1 + $0x88] sm:$0xff]
    %v52 = vld [vmem:[%s1 + $0x90] sm:$0xff]
    %v53 = vld [vmem:[%s1 + $0x98] sm:$0xff]
    %v54 = vld [vmem:[%s1 + $0xa0] sm:$0xff]
    %v55 = vld [vmem:[%s1 + $0xa8] sm:$0xff]
    %v56 = vld [vmem:[%s1 + $0xb0] sm:$0xff]
    %v57 = vld [vmem:[%s1 + $0xb8] sm:$0xff]
    %v58 = vld [vmem:[%s1 + $0xc0] sm:$0xff]
    %v59 = vld [vmem:[%s1 + $0xc8] sm:$0xff]
    %v60 = vld [vmem:[%s1 + $0xd0] sm:$0xff]
    %v61 = vld [vmem:[%s1 + $0xd8] sm:$0xff]
    %v62 = vld [vmem:[%s1 + $0xe0] sm:$0xff]
    %v63 = vld [vmem:[%s1 + $0xe8] sm:$0xff]
    %v64 = vld [vmem:[%s1 + $0xf0] sm:$0xff]
    %v65 = vld [vmem:[%s1 + $0xf8] sm:$0xff]
    %v66 = vld [vmem:[%s1 + $0x100] sm:$0xff]
    %v67 = vld [vmem:[%s1 + $0x108] sm:$0xff]
    %v68 = vld [vmem:[%s1 + $0x110] sm:$0xff]
    %v69 = vld [vmem:[%s1 + $0x118] sm:$0xff]
    %v70 = vld [vmem:[%s1 + $0x120] sm:$0xff]
    %v71 = vld [vmem:[%s1 + $0x128] sm:$0xff]
    %v72 = vld [vmem:[%s1 + $0x130] sm:$0xff]
    %v73 = vld [vmem:[%s1 + $0x138] sm:$0xff]
    %v74 = vld [vmem:[%s2] sm:$0xff]
    %v75 = vld [vmem:[%s2 + $0x8] sm:$0xff]
    %v76 = vld [vmem:[%s2 + $0x10] sm:$0xff]
    %v77 = vld [vmem:[%s2 + $0x18] sm:$0xff]
    %v78 = vld [vmem:[%s2 + $0x20] sm:$0xff]
    %v79 = vld [vmem:[%s2 + $0x28] sm:$0xff]
    %v80 = vld [vmem:[%s2 + $0x30] sm:$0xff]
    %v81 = vld [vmem:[%s2 + $0x38] sm:$0xff]
    %v82 = vld [vmem:[%s2 + $0x40] sm:$0xff]
    %v83 = vld [vmem:[%s2 + $0x48] sm:$0xff]
    %v84 = vld [vmem:[%s2 + $0x50] sm:$0xff]
    %v85 = vld [vmem:[%s2 + $0x58] sm:$0xff]
    %v86 = vld [vmem:[%s2 + $0x60] sm:$0xff]
    %v87 = vld [vmem:[%s2 + $0x68] sm:$0xff]
    %v88 = vld [vmem:[%s2 + $0x70] sm:$0xff]
    %v89 = vld [vmem:[%s2 + $0x78] sm:$0xff]
    %v90 = vld [vmem:[%s2 + $0x80] sm:$0xff]
    %v91 = vld [vmem:[%s2 + $0x88] sm:$0xff]
    %v92 = vld [vmem:[%s2 + $0x90] sm:$0xff]
    %v93 = vld [vmem:[%s2 + $0x98] sm:$0xff]
    %v94 = vld [vmem:[%s2 + $0xa0] sm:$0xff]
    %v95 = vld [vmem:[%s2 + $0xa8] sm:$0xff]
    %v96 = vld [vmem:[%s2 + $0xb0] sm:$0xff]
    %v97 = vld [vmem:[%s2 + $0xb8] sm:$0xff]
    %v98 = vld [vmem:[%s2 + $0xc0] sm:$0xff]
    %v99 = vld [vmem:[%s2 + $0xc8] sm:$0xff]
    %v100 = vld [vmem:[%s2 + $0xd0] sm:$0xff]
    %v101 = vld [vmem:[%s2 + $0xd8] sm:$0xff]
    %v102 = vld [vmem:[%s2 + $0xe0] sm:$0xff]
    %v103 = vld [vmem:[%s2 + $0xe8] sm:$0xff]
    %v104 = vld [vmem:[%s2 + $0xf0] sm:$0xff]
    %v105 = vld [vmem:[%s2 + $0xf8] sm:$0xff]
    %v106 = vld [vmem:[%s2 + $0x100] sm:$0xff]
    %v107 = vld [vmem:[%s2 + $0x108] sm:$0xff]
    %v108 = vld [vmem:[%s2 + $0x110] sm:$0xff]
    %v109 = vld [vmem:[%s2 + $0x118] sm:$0xff]
    %v110 = vld [vmem:[%s2 + $0x120] sm:$0xff]
    %v111 = vld [vmem:[%s2 + $0x128] sm:$0xff]
    %v112 = vld [vmem:[%s2 + $0x130] sm:$0xff]
    %v113 = vld [vmem:[%s2 + $0x138] sm:$0xff]
    %115 = vset.pattern.permute.xlu0 0
    %116 = vperm.xlu0 %115, %v74
    %v117 = vpop.permute.xlu0 %116
    %120 = vset.pattern.permute.xlu0 0
    %121 = vperm.xlu0 %120, %v75
    %v122 = vpop.permute.xlu0 %121
    %125 = vset.pattern.permute.xlu0 0
    %126 = vperm.xlu0 %125, %v76
    %v127 = vpop.permute.xlu0 %126
    %130 = vset.pattern.permute.xlu0 0
    %131 = vperm.xlu0 %130, %v77
    %v132 = vpop.permute.xlu0 %131
    %135 = vset.pattern.permute.xlu0 0
    %136 = vperm.xlu0 %135, %v78
    %v137 = vpop.permute.xlu0 %136
    %140 = vset.pattern.permute.xlu0 0
    %141 = vperm.xlu0 %140, %v79
    %v142 = vpop.permute.xlu0 %141
    %145 = vset.pattern.permute.xlu0 0
    %146 = vperm.xlu0 %145, %v80
    %v147 = vpop.permute.xlu0 %146
    %150 = vset.pattern.permute.xlu0 0
    %151 = vperm.xlu0 %150, %v81
    %v152 = vpop.permute.xlu0 %151
    %155 = vset.pattern.permute.xlu0 0
    %156 = vperm.xlu0 %155, %v82
    %v157 = vpop.permute.xlu0 %156
    %160 = vset.pattern.permute.xlu0 0
    %161 = vperm.xlu0 %160, %v83
    %v162 = vpop.permute.xlu0 %161
    %165 = vset.pattern.permute.xlu0 0
    %166 = vperm.xlu0 %165, %v84
    %v167 = vpop.permute.xlu0 %166
    %170 = vset.pattern.permute.xlu0 0
    %171 = vperm.xlu0 %170, %v85
    %v172 = vpop.permute.xlu0 %171
    %175 = vset.pattern.permute.xlu0 0
    %176 = vperm.xlu0 %175, %v86
    %v177 = vpop.permute.xlu0 %176
    %180 = vset.pattern.permute.xlu0 0
    %181 = vperm.xlu0 %180, %v87
    %v182 = vpop.permute.xlu0 %181
    %185 = vset.pattern.permute.xlu0 0
    %186 = vperm.xlu0 %185, %v88
    %v187 = vpop.permute.xlu0 %186
    %190 = vset.pattern.permute.xlu0 0
    %191 = vperm.xlu0 %190, %v89
    %v192 = vpop.permute.xlu0 %191
    %195 = vset.pattern.permute.xlu0 0
    %196 = vperm.xlu0 %195, %v90
    %v197 = vpop.permute.xlu0 %196
    %200 = vset.pattern.permute.xlu0 0
    %201 = vperm.xlu0 %200, %v91
    %v202 = vpop.permute.xlu0 %201
    %205 = vset.pattern.permute.xlu0 0
    %206 = vperm.xlu0 %205, %v92
    %v207 = vpop.permute.xlu0 %206
    %210 = vset.pattern.permute.xlu0 0
    %211 = vperm.xlu0 %210, %v93
    %v212 = vpop.permute.xlu0 %211
    %215 = vset.pattern.permute.xlu0 0
    %216 = vperm.xlu0 %215, %v94
    %v217 = vpop.permute.xlu0 %216
    %220 = vset.pattern.permute.xlu0 0
    %221 = vperm.xlu0 %220, %v95
    %v222 = vpop.permute.xlu0 %221
    %225 = vset.pattern.permute.xlu0 0
    %226 = vperm.xlu0 %225, %v96
    %v227 = vpop.permute.xlu0 %226
    %230 = vset.pattern.permute.xlu0 0
    %231 = vperm.xlu0 %230, %v97
    %v232 = vpop.permute.xlu0 %231
    %235 = vset.pattern.permute.xlu0 0
    %236 = vperm.xlu0 %235, %v98
    %v237 = vpop.permute.xlu0 %236
    %240 = vset.pattern.permute.xlu0 0
    %241 = vperm.xlu0 %240, %v99
    %v242 = vpop.permute.xlu0 %241
    %245 = vset.pattern.permute.xlu0 0
    %246 = vperm.xlu0 %245, %v100
    %v247 = vpop.permute.xlu0 %246
    %250 = vset.pattern.permute.xlu0 0
    %251 = vperm.xlu0 %250, %v101
    %v252 = vpop.permute.xlu0 %251
    %255 = vset.pattern.permute.xlu0 0
    %256 = vperm.xlu0 %255, %v102
    %v257 = vpop.permute.xlu0 %256
    %260 = vset.pattern.permute.xlu0 0
    %261 = vperm.xlu0 %260, %v103
    %v262 = vpop.permute.xlu0 %261
    %265 = vset.pattern.permute.xlu0 0
    %266 = vperm.xlu0 %265, %v104
    %v267 = vpop.permute.xlu0 %266
    %270 = vset.pattern.permute.xlu0 0
    %271 = vperm.xlu0 %270, %v105
    %v272 = vpop.permute.xlu0 %271
    %275 = vset.pattern.permute.xlu0 0
    %276 = vperm.xlu0 %275, %v106
    %v277 = vpop.permute.xlu0 %276
    %280 = vset.pattern.permute.xlu0 0
    %281 = vperm.xlu0 %280, %v107
    %v282 = vpop.permute.xlu0 %281
    %285 = vset.pattern.permute.xlu0 0
    %286 = vperm.xlu0 %285, %v108
    %v287 = vpop.permute.xlu0 %286
    %290 = vset.pattern.permute.xlu0 0
    %291 = vperm.xlu0 %290, %v109
    %v292 = vpop.permute.xlu0 %291
    %295 = vset.pattern.permute.xlu0 0
    %296 = vperm.xlu0 %295, %v110
    %v297 = vpop.permute.xlu0 %296
    %300 = vset.pattern.permute.xlu0 0
    %301 = vperm.xlu0 %300, %v111
    %v302 = vpop.permute.xlu0 %301
    %305 = vset.pattern.permute.xlu0 0
    %306 = vperm.xlu0 %305, %v112
    %v307 = vpop.permute.xlu0 %306
    %310 = vset.pattern.permute.xlu0 0
    %311 = vperm.xlu0 %310, %v113
    %v312 = vpop.permute.xlu0 %311
    %vm314 = vcmask 261120
    %v316 = vsel %vm314, %v34, 0
    %v319 = vsel %vm314, %v35, 0
    %v322 = vsel %vm314, %v36, 0
    %v325 = vsel %vm314, %v37, 0
    %v328 = vsel %vm314, %v38, 0
    %v331 = vsel %vm314, %v39, 0
    %v334 = vsel %vm314, %v40, 0
    %v337 = vsel %vm314, %v41, 0
    %v340 = vsel %vm314, %v42, 0
    %v343 = vsel %vm314, %v43, 0
    %v346 = vsel %vm314, %v44, 0
    %v349 = vsel %vm314, %v45, 0
    %v352 = vsel %vm314, %v46, 0
    %v355 = vsel %vm314, %v47, 0
    %v358 = vsel %vm314, %v48, 0
    %v361 = vsel %vm314, %v49, 0
    %v364 = vsel %vm314, %v50, 0
    %v367 = vsel %vm314, %v51, 0
    %v370 = vsel %vm314, %v52, 0
    %v373 = vsel %vm314, %v53, 0
    %v376 = vsel %vm314, %v54, 0
    %v379 = vsel %vm314, %v55, 0
    %v382 = vsel %vm314, %v56, 0
    %v385 = vsel %vm314, %v57, 0
    %v388 = vsel %vm314, %v58, 0
    %v391 = vsel %vm314, %v59, 0
    %v394 = vsel %vm314, %v60, 0
    %v397 = vsel %vm314, %v61, 0
    %v400 = vsel %vm314, %v62, 0
    %v403 = vsel %vm314, %v63, 0
    %v406 = vsel %vm314, %v64, 0
    %v409 = vsel %vm314, %v65, 0
    %v412 = vsel %vm314, %v66, 0
    %v415 = vsel %vm314, %v67, 0
    %v418 = vsel %vm314, %v68, 0
    %v421 = vsel %vm314, %v69, 0
    %v424 = vsel %vm314, %v70, 0
    %v427 = vsel %vm314, %v71, 0
    %v430 = vsel %vm314, %v72, 0
    %v433 = vsel %vm314, %v73, 0
    %435 = vmatprep.subr.mxu0 0.0
    %436 = vmatpush1.msra.mxu0 %v30
    %437 = vmatprep.subr.mxu0 0.0
    %438 = vmatpush1.msra.mxu0 %v31
    %439 = vmatprep.subr.mxu0 0.0
    %440 = vmatpush1.msra.mxu0 %v32
    %441 = vmatprep.subr.mxu0 0.0
    %442 = vmatpush1.msra.mxu0 %v33
    %443 = vmatprep.subr.mxu0 0.0
    %444 = vmatpush1.msra.mxu0 0.0
    %445 = vmatprep.subr.mxu0 0.0
    %446 = vmatpush1.msra.mxu0 0.0
    %447 = vmatprep.subr.mxu0 0.0
    %448 = vmatpush1.msra.mxu0 0.0
    %449 = vmatprep.subr.mxu0 0.0
    %450 = vmatpush1.msra.mxu0 0.0
    %451 = vmatprep.subr.mxu0 0.0
    %452 = vmatpush1.msra.mxu0 0.0
    %453 = vmatprep.subr.mxu0 0.0
    %454 = vmatpush1.msra.mxu0 0.0
    %455 = vmatprep.subr.mxu0 0.0
    %456 = vmatpush1.msra.mxu0 0.0
    %457 = vmatprep.subr.mxu0 0.0
    %458 = vmatpush1.msra.mxu0 0.0
    %459 = vmatprep.subr.mxu0 0.0
    %460 = vmatpush1.msra.mxu0 0.0
    %461 = vmatprep.subr.mxu0 0.0
    %462 = vmatpush1.msra.mxu0 0.0
    %463 = vmatprep.subr.mxu0 0.0
    %464 = vmatpush1.msra.mxu0 0.0
    %465 = vmatprep.subr.mxu0 0.0
    %466 = vmatpush1.msra.mxu0 0.0
    %467 = vmatprep.subr.mxu0 0.0
    %468 = vmatpush1.msra.mxu0 0.0
    %469 = vmatprep.subr.mxu0 0.0
    %470 = vmatpush1.msra.mxu0 0.0
    %471 = vmatprep.subr.mxu0 0.0
    %472 = vmatpush1.msra.mxu0 0.0
    %473 = vmatprep.subr.mxu0 0.0
    %474 = vmatpush1.msra.mxu0 0.0
    %475 = vmatprep.subr.mxu0 0.0
    %476 = vmatpush1.msra.mxu0 0.0
    %477 = vmatprep.subr.mxu0 0.0
    %478 = vmatpush1.msra.mxu0 0.0
    %479 = vmatprep.subr.mxu0 0.0
    %480 = vmatpush1.msra.mxu0 0.0
    %481 = vmatprep.subr.mxu0 0.0
    %482 = vmatpush1.msra.mxu0 0.0
    %483 = vmatprep.subr.mxu0 0.0
    %484 = vmatpush1.msra.mxu0 0.0
    %485 = vmatprep.subr.mxu0 0.0
    %486 = vmatpush1.msra.mxu0 0.0
    %487 = vmatprep.subr.mxu0 0.0
    %488 = vmatpush1.msra.mxu0 0.0
    %489 = vmatprep.subr.mxu0 0.0
    %490 = vmatpush1.msra.mxu0 0.0
    %491 = vmatprep.subr.mxu0 0.0
    %492 = vmatpush1.msra.mxu0 0.0
    %493 = vmatprep.subr.mxu0 0.0
    %494 = vmatpush1.msra.mxu0 0.0
    %495 = vmatprep.subr.mxu0 0.0
    %496 = vmatpush1.msra.mxu0 0.0
    %497 = vmatprep.subr.mxu0 0.0
    %498 = vmatpush1.msra.mxu0 0.0
    %499 = vmatprep.mubr.f32.mxu0 0.0
    %500 = vmatmul.mubr.f32.gmra.mrb[0].mxu0 %v316
    %v501 = vpop.f32.mrb[0].mxu0
    %v502 = vadd.f32 %v117, %v501
    %v503 = vpop.f32.mrb[0].mxu0
    %504 = vmatprep.mubr.f32.mxu0 0.0
    %505 = vmatmul.mubr.f32.gmra.mrb[0].mxu0 %v319
    %v506 = vpop.f32.mrb[0].mxu0
    %v507 = vadd.f32 %v122, %v506
    %v508 = vpop.f32.mrb[0].mxu0
    %509 = vmatprep.mubr.f32.mxu0 0.0
    %510 = vmatmul.mubr.f32.gmra.mrb[0].mxu0 %v322
    %v511 = vpop.f32.mrb[0].mxu0
    %v512 = vadd.f32 %v127, %v511
    %v513 = vpop.f32.mrb[0].mxu0
    %514 = vmatprep.mubr.f32.mxu0 0.0
    %515 = vmatmul.mubr.f32.gmra.mrb[0].mxu0 %v325
    %v516 = vpop.f32.mrb[0].mxu0
    %v517 = vadd.f32 %v132, %v516
    %v518 = vpop.f32.mrb[0].mxu0
    %519 = vmatprep.mubr.f32.mxu0 0.0
    %520 = vmatmul.mubr.f32.gmra.mrb[0].mxu0 %v328
    %v521 = vpop.f32.mrb[0].mxu0
    %v522 = vadd.f32 %v137, %v521
    %v523 = vpop.f32.mrb[0].mxu0
    %524 = vmatprep.mubr.f32.mxu0 0.0
    %525 = vmatmul.mubr.f32.gmra.mrb[0].mxu0 %v331
    %v526 = vpop.f32.mrb[0].mxu0
    %v527 = vadd.f32 %v142, %v526
    %v528 = vpop.f32.mrb[0].mxu0
    %529 = vmatprep.mubr.f32.mxu0 0.0
    %530 = vmatmul.mubr.f32.gmra.mrb[0].mxu0 %v334
    %v531 = vpop.f32.mrb[0].mxu0
    %v532 = vadd.f32 %v147, %v531
    %v533 = vpop.f32.mrb[0].mxu0
    %534 = vmatprep.mubr.f32.mxu0 0.0
    %535 = vmatmul.mubr.f32.gmra.mrb[0].mxu0 %v337
    %v536 = vpop.f32.mrb[0].mxu0
    %v537 = vadd.f32 %v152, %v536
    %v538 = vpop.f32.mrb[0].mxu0
    %539 = vmatprep.mubr.f32.mxu0 0.0
    %540 = vmatmul.mubr.f32.gmra.mrb[0].mxu0 %v340
    %v541 = vpop.f32.mrb[0].mxu0
    %v542 = vadd.f32 %v157, %v541
    %v543 = vpop.f32.mrb[0].mxu0
    %544 = vmatprep.mubr.f32.mxu0 0.0
    %545 = vmatmul.mubr.f32.gmra.mrb[0].mxu0 %v343
    %v546 = vpop.f32.mrb[0].mxu0
    %v547 = vadd.f32 %v162, %v546
    %v548 = vpop.f32.mrb[0].mxu0
    %549 = vmatprep.mubr.f32.mxu0 0.0
    %550 = vmatmul.mubr.f32.gmra.mrb[0].mxu0 %v346
    %v551 = vpop.f32.mrb[0].mxu0
    %v552 = vadd.f32 %v167, %v551
    %v553 = vpop.f32.mrb[0].mxu0
    %554 = vmatprep.mubr.f32.mxu0 0.0
    %555 = vmatmul.mubr.f32.gmra.mrb[0].mxu0 %v349
    %v556 = vpop.f32.mrb[0].mxu0
    %v557 = vadd.f32 %v172, %v556
    %v558 = vpop.f32.mrb[0].mxu0
    %559 = vmatprep.mubr.f32.mxu0 0.0
    %560 = vmatmul.mubr.f32.gmra.mrb[0].mxu0 %v352
    %v561 = vpop.f32.mrb[0].mxu0
    %v562 = vadd.f32 %v177, %v561
    %v563 = vpop.f32.mrb[0].mxu0
    %564 = vmatprep.mubr.f32.mxu0 0.0
    %565 = vmatmul.mubr.f32.gmra.mrb[0].mxu0 %v355
    %v566 = vpop.f32.mrb[0].mxu0
    %v567 = vadd.f32 %v182, %v566
    %v568 = vpop.f32.mrb[0].mxu0
    %569 = vmatprep.mubr.f32.mxu0 0.0
    %570 = vmatmul.mubr.f32.gmra.mrb[0].mxu0 %v358
    %v571 = vpop.f32.mrb[0].mxu0
    %v572 = vadd.f32 %v187, %v571
    %v573 = vpop.f32.mrb[0].mxu0
    %574 = vmatprep.mubr.f32.mxu0 0.0
    %575 = vmatmul.mubr.f32.gmra.mrb[0].mxu0 %v361
    %v576 = vpop.f32.mrb[0].mxu0
    %v577 = vadd.f32 %v192, %v576
    %v578 = vpop.f32.mrb[0].mxu0
    %579 = vmatprep.mubr.f32.mxu0 0.0
    %580 = vmatmul.mubr.f32.gmra.mrb[0].mxu0 %v364
    %v581 = vpop.f32.mrb[0].mxu0
    %v582 = vadd.f32 %v197, %v581
    %v583 = vpop.f32.mrb[0].mxu0
    %584 = vmatprep.mubr.f32.mxu0 0.0
    %585 = vmatmul.mubr.f32.gmra.mrb[0].mxu0 %v367
    %v586 = vpop.f32.mrb[0].mxu0
    %v587 = vadd.f32 %v202, %v586
    %v588 = vpop.f32.mrb[0].mxu0
    %589 = vmatprep.mubr.f32.mxu0 0.0
    %590 = vmatmul.mubr.f32.gmra.mrb[0].mxu0 %v370
    %v591 = vpop.f32.mrb[0].mxu0
    %v592 = vadd.f32 %v207, %v591
    %v593 = vpop.f32.mrb[0].mxu0
    %594 = vmatprep.mubr.f32.mxu0 0.0
    %595 = vmatmul.mubr.f32.gmra.mrb[0].mxu0 %v373
    %v596 = vpop.f32.mrb[0].mxu0
    %v597 = vadd.f32 %v212, %v596
    %v598 = vpop.f32.mrb[0].mxu0
    %599 = vmatprep.mubr.f32.mxu0 0.0
    %600 = vmatmul.mubr.f32.gmra.mrb[0].mxu0 %v376
    %v601 = vpop.f32.mrb[0].mxu0
    %v602 = vadd.f32 %v217, %v601
    %v603 = vpop.f32.mrb[0].mxu0
    %604 = vmatprep.mubr.f32.mxu0 0.0
    %605 = vmatmul.mubr.f32.gmra.mrb[0].mxu0 %v379
    %v606 = vpop.f32.mrb[0].mxu0
    %v607 = vadd.f32 %v222, %v606
    %v608 = vpop.f32.mrb[0].mxu0
    %609 = vmatprep.mubr.f32.mxu0 0.0
    %610 = vmatmul.mubr.f32.gmra.mrb[0].mxu0 %v382
    %v611 = vpop.f32.mrb[0].mxu0
    %v612 = vadd.f32 %v227, %v611
    %v613 = vpop.f32.mrb[0].mxu0
    %614 = vmatprep.mubr.f32.mxu0 0.0
    %615 = vmatmul.mubr.f32.gmra.mrb[0].mxu0 %v385
    %v616 = vpop.f32.mrb[0].mxu0
    %v617 = vadd.f32 %v232, %v616
    %v618 = vpop.f32.mrb[0].mxu0
    %619 = vmatprep.mubr.f32.mxu0 0.0
    %620 = vmatmul.mubr.f32.gmra.mrb[0].mxu0 %v388
    %v621 = vpop.f32.mrb[0].mxu0
    %v622 = vadd.f32 %v237, %v621
    %v623 = vpop.f32.mrb[0].mxu0
    %624 = vmatprep.mubr.f32.mxu0 0.0
    %625 = vmatmul.mubr.f32.gmra.mrb[0].mxu0 %v391
    %v626 = vpop.f32.mrb[0].mxu0
    %v627 = vadd.f32 %v242, %v626
    %v628 = vpop.f32.mrb[0].mxu0
    %629 = vmatprep.mubr.f32.mxu0 0.0
    %630 = vmatmul.mubr.f32.gmra.mrb[0].mxu0 %v394
    %v631 = vpop.f32.mrb[0].mxu0
    %v632 = vadd.f32 %v247, %v631
    %v633 = vpop.f32.mrb[0].mxu0
    %634 = vmatprep.mubr.f32.mxu0 0.0
    %635 = vmatmul.mubr.f32.gmra.mrb[0].mxu0 %v397
    %v636 = vpop.f32.mrb[0].mxu0
    %v637 = vadd.f32 %v252, %v636
    %v638 = vpop.f32.mrb[0].mxu0
    %639 = vmatprep.mubr.f32.mxu0 0.0
    %640 = vmatmul.mubr.f32.gmra.mrb[0].mxu0 %v400
    %v641 = vpop.f32.mrb[0].mxu0
    %v642 = vadd.f32 %v257, %v641
    %v643 = vpop.f32.mrb[0].mxu0
    %644 = vmatprep.mubr.f32.mxu0 0.0
    %645 = vmatmul.mubr.f32.gmra.mrb[0].mxu0 %v403
    %v646 = vpop.f32.mrb[0].mxu0
    %v647 = vadd.f32 %v262, %v646
    %v648 = vpop.f32.mrb[0].mxu0
    %649 = vmatprep.mubr.f32.mxu0 0.0
    %650 = vmatmul.mubr.f32.gmra.mrb[0].mxu0 %v406
    %v651 = vpop.f32.mrb[0].mxu0
    %v652 = vadd.f32 %v267, %v651
    %v653 = vpop.f32.mrb[0].mxu0
    %654 = vmatprep.mubr.f32.mxu0 0.0
    %655 = vmatmul.mubr.f32.gmra.mrb[0].mxu0 %v409
    %v656 = vpop.f32.mrb[0].mxu0
    %v657 = vadd.f32 %v272, %v656
    %v658 = vpop.f32.mrb[0].mxu0
    %659 = vmatprep.mubr.f32.mxu0 0.0
    %660 = vmatmul.mubr.f32.gmra.mrb[0].mxu0 %v412
    %v661 = vpop.f32.mrb[0].mxu0
    %v662 = vadd.f32 %v277, %v661
    %v663 = vpop.f32.mrb[0].mxu0
    %664 = vmatprep.mubr.f32.mxu0 0.0
    %665 = vmatmul.mubr.f32.gmra.mrb[0].mxu0 %v415
    %v666 = vpop.f32.mrb[0].mxu0
    %v667 = vadd.f32 %v282, %v666
    %v668 = vpop.f32.mrb[0].mxu0
    %669 = vmatprep.mubr.f32.mxu0 0.0
    %670 = vmatmul.mubr.f32.gmra.mrb[0].mxu0 %v418
    %v671 = vpop.f32.mrb[0].mxu0
    %v672 = vadd.f32 %v287, %v671
    %v673 = vpop.f32.mrb[0].mxu0
    %674 = vmatprep.mubr.f32.mxu0 0.0
    %675 = vmatmul.mubr.f32.gmra.mrb[0].mxu0 %v421
    %v676 = vpop.f32.mrb[0].mxu0
    %v677 = vadd.f32 %v292, %v676
    %v678 = vpop.f32.mrb[0].mxu0
    %679 = vmatprep.mubr.f32.mxu0 0.0
    %680 = vmatmul.mubr.f32.gmra.mrb[0].mxu0 %v424
    %v681 = vpop.f32.mrb[0].mxu0
    %v682 = vadd.f32 %v297, %v681
    %v683 = vpop.f32.mrb[0].mxu0
    %684 = vmatprep.mubr.f32.mxu0 0.0
    %685 = vmatmul.mubr.f32.gmra.mrb[0].mxu0 %v427
    %v686 = vpop.f32.mrb[0].mxu0
    %v687 = vadd.f32 %v302, %v686
    %v688 = vpop.f32.mrb[0].mxu0
    %689 = vmatprep.mubr.f32.mxu0 0.0
    %690 = vmatmul.mubr.f32.gmra.mrb[0].mxu0 %v430
    %v691 = vpop.f32.mrb[0].mxu0
    %v692 = vadd.f32 %v307, %v691
    %v693 = vpop.f32.mrb[0].mxu0
    %694 = vmatprep.mubr.f32.mxu0 0.0
    %695 = vmatmul.mubr.f32.gmra.mrb[0].mxu0 %v433
    %v696 = vpop.f32.mrb[0].mxu0
    %v697 = vadd.f32 %v312, %v696
    %v698 = vpop.f32.mrb[0].mxu0
    %699 = vdwg.mxu0
    %v700 = vmax.f32 %v502, 0.0
    %v701 = vmax.f32 %v507, 0.0
    %v702 = vmax.f32 %v512, 0.0
    %v703 = vmax.f32 %v517, 0.0
    %v704 = vmax.f32 %v522, 0.0
    %v705 = vmax.f32 %v527, 0.0
    %v706 = vmax.f32 %v532, 0.0
    %v707 = vmax.f32 %v537, 0.0
    %v708 = vmax.f32 %v542, 0.0
    %v709 = vmax.f32 %v547, 0.0
    %v710 = vmax.f32 %v552, 0.0
    %v711 = vmax.f32 %v557, 0.0
    %v712 = vmax.f32 %v562, 0.0
    %v713 = vmax.f32 %v567, 0.0
    %v714 = vmax.f32 %v572, 0.0
    %v715 = vmax.f32 %v577, 0.0
    %v716 = vmax.f32 %v582, 0.0
    %v717 = vmax.f32 %v587, 0.0
    %v718 = vmax.f32 %v592, 0.0
    %v719 = vmax.f32 %v597, 0.0
    %v720 = vmax.f32 %v602, 0.0
    %v721 = vmax.f32 %v607, 0.0
    %v722 = vmax.f32 %v612, 0.0
    %v723 = vmax.f32 %v617, 0.0
    %v724 = vmax.f32 %v622, 0.0
    %v725 = vmax.f32 %v627, 0.0
    %v726 = vmax.f32 %v632, 0.0
    %v727 = vmax.f32 %v637, 0.0
    %v728 = vmax.f32 %v642, 0.0
    %v729 = vmax.f32 %v647, 0.0
    %v730 = vmax.f32 %v652, 0.0
    %v731 = vmax.f32 %v657, 0.0
    %v732 = vmax.f32 %v662, 0.0
    %v733 = vmax.f32 %v667, 0.0
    %v734 = vmax.f32 %v672, 0.0
    %v735 = vmax.f32 %v677, 0.0
    %v736 = vmax.f32 %v682, 0.0
    %v737 = vmax.f32 %v687, 0.0
    %v738 = vmax.f32 %v692, 0.0
    %v739 = vmax.f32 %v697, 0.0
    %v740 = vld [vmem:[%s3] sm:$0xff]
    %v741 = vld [vmem:[%s3 + $0x8] sm:$0xff]
    %v742 = vld [vmem:[%s3 + $0x10] sm:$0xff]
    %v743 = vld [vmem:[%s3 + $0x18] sm:$0xff]
    %v744 = vld [vmem:[%s3 + $0x20] sm:$0xff]
    %v745 = vld [vmem:[%s3 + $0x28] sm:$0xff]
    %v746 = vld [vmem:[%s3 + $0x30] sm:$0xff]
    %v747 = vld [vmem:[%s3 + $0x38] sm:$0xff]
    %v748 = vld [vmem:[%s3 + $0x40] sm:$0xff]
    %v749 = vld [vmem:[%s3 + $0x48] sm:$0xff]
    %v750 = vld [vmem:[%s3 + $0x50] sm:$0xff]
    %v751 = vld [vmem:[%s3 + $0x58] sm:$0xff]
    %v752 = vld [vmem:[%s3 + $0x60] sm:$0xff]
    %v753 = vld [vmem:[%s3 + $0x68] sm:$0xff]
    %v754 = vld [vmem:[%s3 + $0x70] sm:$0xff]
    %v755 = vld [vmem:[%s3 + $0x78] sm:$0xff]
    %v756 = vld [vmem:[%s3 + $0x80] sm:$0xff]
    %v757 = vld [vmem:[%s3 + $0x88] sm:$0xff]
    %v758 = vld [vmem:[%s3 + $0x90] sm:$0xff]
    %v759 = vld [vmem:[%s3 + $0x98] sm:$0xff]
    %v760 = vld [vmem:[%s3 + $0xa0] sm:$0xff]
    %v761 = vld [vmem:[%s3 + $0xa8] sm:$0xff]
    %v762 = vld [vmem:[%s3 + $0xb0] sm:$0xff]
    %v763 = vld [vmem:[%s3 + $0xb8] sm:$0xff]
    %v764 = vld [vmem:[%s3 + $0xc0] sm:$0xff]
    %v765 = vld [vmem:[%s3 + $0xc8] sm:$0xff]
    %v766 = vld [vmem:[%s3 + $0xd0] sm:$0xff]
    %v767 = vld [vmem:[%s3 + $0xd8] sm:$0xff]
    %v768 = vld [vmem:[%s3 + $0xe0] sm:$0xff]
    %v769 = vld [vmem:[%s3 + $0xe8] sm:$0xff]
    %v770 = vld [vmem:[%s3 + $0xf0] sm:$0xff]
    %v771 = vld [vmem:[%s3 + $0xf8] sm:$0xff]
    %v772 = vld [vmem:[%s3 + $0x100] sm:$0xff]
    %v773 = vld [vmem:[%s3 + $0x108] sm:$0xff]
    %v774 = vld [vmem:[%s3 + $0x110] sm:$0xff]
    %v775 = vld [vmem:[%s3 + $0x118] sm:$0xff]
    %v776 = vld [vmem:[%s3 + $0x120] sm:$0xff]
    %v777 = vld [vmem:[%s3 + $0x128] sm:$0xff]
    %v778 = vld [vmem:[%s3 + $0x130] sm:$0xff]
    %v779 = vld [vmem:[%s3 + $0x138] sm:$0xff]
    %v780 = vld [vmem:[%s3 + $0x140] sm:$0xff]
    %v781 = vld [vmem:[%s3 + $0x148] sm:$0xff]
    %v782 = vld [vmem:[%s3 + $0x150] sm:$0xff]
    %v783 = vld [vmem:[%s3 + $0x158] sm:$0xff]
    %v784 = vld [vmem:[%s3 + $0x160] sm:$0xff]
    %v785 = vld [vmem:[%s3 + $0x168] sm:$0xff]
    %v786 = vld [vmem:[%s3 + $0x170] sm:$0xff]
    %v787 = vld [vmem:[%s3 + $0x178] sm:$0xff]
    %v788 = vld [vmem:[%s3 + $0x180] sm:$0xff]
    %v789 = vld [vmem:[%s3 + $0x188] sm:$0xff]
    %v790 = vld [vmem:[%s3 + $0x190] sm:$0xff]
    %v791 = vld [vmem:[%s3 + $0x198] sm:$0xff]
    %v792 = vld [vmem:[%s3 + $0x1a0] sm:$0xff]
    %v793 = vld [vmem:[%s3 + $0x1a8] sm:$0xff]
    %v794 = vld [vmem:[%s3 + $0x1b0] sm:$0xff]
    %v795 = vld [vmem:[%s3 + $0x1b8] sm:$0xff]
    %v796 = vld [vmem:[%s3 + $0x1c0] sm:$0xff]
    %v797 = vld [vmem:[%s3 + $0x1c8] sm:$0xff]
    %v798 = vld [vmem:[%s3 + $0x1d0] sm:$0xff]
    %v799 = vld [vmem:[%s3 + $0x1d8] sm:$0xff]
    %vm800 = vcmask 523264
    %v802 = vsel %vm800, %v742, 0
    %v805 = vsel %vm800, %v745, 0
    %v808 = vsel %vm800, %v748, 0
    %v811 = vsel %vm800, %v751, 0
    %v814 = vsel %vm800, %v754, 0
    %v817 = vsel %vm800, %v757, 0
    %v820 = vsel %vm800, %v760, 0
    %v823 = vsel %vm800, %v763, 0
    %v826 = vsel %vm800, %v766, 0
    %v829 = vsel %vm800, %v769, 0
    %v832 = vsel %vm800, %v772, 0
    %v835 = vsel %vm800, %v775, 0
    %v838 = vsel %vm800, %v778, 0
    %v841 = vsel %vm800, %v781, 0
    %v844 = vsel %vm800, %v784, 0
    %v847 = vsel %vm800, %v787, 0
    %v850 = vsel %vm800, %v790, 0
    %v853 = vsel %vm800, %v793, 0
    %v856 = vsel %vm800, %v796, 0
    %v859 = vsel %vm800, %v799, 0
    %861 = vmatprep.subr.mxu0 0.0
    %862 = vmatpush1.msra.mxu0 %v700
    %863 = vmatprep.subr.mxu0 0.0
    %864 = vmatpush1.msra.mxu0 %v701
    %865 = vmatprep.subr.mxu0 0.0
    %866 = vmatpush1.msra.mxu0 %v702
    %867 = vmatprep.subr.mxu0 0.0
    %868 = vmatpush1.msra.mxu0 %v703
    %869 = vmatprep.subr.mxu0 0.0
    %870 = vmatpush1.msra.mxu0 %v704
    %871 = vmatprep.subr.mxu0 0.0
    %872 = vmatpush1.msra.mxu0 %v705
    %873 = vmatprep.subr.mxu0 0.0
    %874 = vmatpush1.msra.mxu0 %v706
    %875 = vmatprep.subr.mxu0 0.0
    %876 = vmatpush1.msra.mxu0 %v707
    %877 = vmatprep.subr.mxu0 0.0
    %878 = vmatpush1.msra.mxu0 %v708
    %879 = vmatprep.subr.mxu0 0.0
    %880 = vmatpush1.msra.mxu0 %v709
    %881 = vmatprep.subr.mxu0 0.0
    %882 = vmatpush1.msra.mxu0 %v710
    %883 = vmatprep.subr.mxu0 0.0
    %884 = vmatpush1.msra.mxu0 %v711
    %885 = vmatprep.subr.mxu0 0.0
    %886 = vmatpush1.msra.mxu0 %v712
    %887 = vmatprep.subr.mxu0 0.0
    %888 = vmatpush1.msra.mxu0 %v713
    %889 = vmatprep.subr.mxu0 0.0
    %890 = vmatpush1.msra.mxu0 %v714
    %891 = vmatprep.subr.mxu0 0.0
    %892 = vmatpush1.msra.mxu0 %v715
    %893 = vmatprep.subr.mxu0 0.0
    %894 = vmatpush1.msra.mxu0 %v716
    %895 = vmatprep.subr.mxu0 0.0
    %896 = vmatpush1.msra.mxu0 %v717
    %897 = vmatprep.subr.mxu0 0.0
    %898 = vmatpush1.msra.mxu0 %v718
    %899 = vmatprep.subr.mxu0 0.0
    %900 = vmatpush1.msra.mxu0 %v719
    %901 = vmatprep.subr.mxu0 0.0
    %902 = vmatpush1.msra.mxu0 %v720
    %903 = vmatprep.subr.mxu0 0.0
    %904 = vmatpush1.msra.mxu0 %v721
    %905 = vmatprep.subr.mxu0 0.0
    %906 = vmatpush1.msra.mxu0 %v722
    %907 = vmatprep.subr.mxu0 0.0
    %908 = vmatpush1.msra.mxu0 %v723
    %909 = vmatprep.subr.mxu0 0.0
    %910 = vmatpush1.msra.mxu0 %v724
    %911 = vmatprep.subr.mxu0 0.0
    %912 = vmatpush1.msra.mxu0 %v725
    %913 = vmatprep.subr.mxu0 0.0
    %914 = vmatpush1.msra.mxu0 %v726
    %915 = vmatprep.subr.mxu0 0.0
    %916 = vmatpush1.msra.mxu0 %v727
    %917 = vmatprep.subr.mxu0 0.0
    %918 = vmatpush1.msra.mxu0 %v728
    %919 = vmatprep.subr.mxu0 0.0
    %920 = vmatpush1.msra.mxu0 %v729
    %921 = vmatprep.subr.mxu0 0.0
    %922 = vmatpush1.msra.mxu0 %v730
    %923 = vmatprep.subr.mxu0 0.0
    %924 = vmatpush1.msra.mxu0 %v731
    %925 = vmatprep.mubr.f32.mxu0 %v741
    %926 = vmatmul.mubr.f32.gmra.mrb[0].mxu0 %v740
    %v927 = vpop.f32.mrb[0].mxu0
    %v928 = vadd.f32 0.0, %v927
    %v929 = vpop.f32.mrb[0].mxu0
    %930 = vmatprep.mubr.f32.mxu0 %v744
    %931 = vmatmul.mubr.f32.gmra.mrb[0].mxu0 %v743
    %v932 = vpop.f32.mrb[0].mxu0
    %v933 = vadd.f32 0.0, %v932
    %v934 = vpop.f32.mrb[0].mxu0
    %935 = vmatprep.mubr.f32.mxu0 %v747
    %936 = vmatmul.mubr.f32.gmra.mrb[0].mxu0 %v746
    %v937 = vpop.f32.mrb[0].mxu0
    %v938 = vadd.f32 0.0, %v937
    %v939 = vpop.f32.mrb[0].mxu0
    %940 = vmatprep.mubr.f32.mxu0 %v750
    %941 = vmatmul.mubr.f32.gmra.mrb[0].mxu0 %v749
    %v942 = vpop.f32.mrb[0].mxu0
    %v943 = vadd.f32 0.0, %v942
    %v944 = vpop.f32.mrb[0].mxu0
    %945 = vmatprep.mubr.f32.mxu0 %v753
    %946 = vmatmul.mubr.f32.gmra.mrb[0].mxu0 %v752
    %v947 = vpop.f32.mrb[0].mxu0
    %v948 = vadd.f32 0.0, %v947
    %v949 = vpop.f32.mrb[0].mxu0
    %950 = vmatprep.mubr.f32.mxu0 %v756
    %951 = vmatmul.mubr.f32.gmra.mrb[0].mxu0 %v755
    %v952 = vpop.f32.mrb[0].mxu0
    %v953 = vadd.f32 0.0, %v952
    %v954 = vpop.f32.mrb[0].mxu0
    %955 = vmatprep.mubr.f32.mxu0 %v759
    %956 = vmatmul.mubr.f32.gmra.mrb[0].mxu0 %v758
    %v957 = vpop.f32.mrb[0].mxu0
    %v958 = vadd.f32 0.0, %v957
    %v959 = vpop.f32.mrb[0].mxu0
    %960 = vmatprep.mubr.f32.mxu0 %v762
    %961 = vmatmul.mubr.f32.gmra.mrb[0].mxu0 %v761
    %v962 = vpop.f32.mrb[0].mxu0
    %v963 = vadd.f32 0.0, %v962
    %v964 = vpop.f32.mrb[0].mxu0
    %965 = vmatprep.mubr.f32.mxu0 %v765
    %966 = vmatmul.mubr.f32.gmra.mrb[0].mxu0 %v764
    %v967 = vpop.f32.mrb[0].mxu0
    %v968 = vadd.f32 0.0, %v967
    %v969 = vpop.f32.mrb[0].mxu0
    %970 = vmatprep.mubr.f32.mxu0 %v768
    %971 = vmatmul.mubr.f32.gmra.mrb[0].mxu0 %v767
    %v972 = vpop.f32.mrb[0].mxu0
    %v973 = vadd.f32 0.0, %v972
    %v974 = vpop.f32.mrb[0].mxu0
    %975 = vmatprep.mubr.f32.mxu0 %v771
    %976 = vmatmul.mubr.f32.gmra.mrb[0].mxu0 %v770
    %v977 = vpop.f32.mrb[0].mxu0
    %v978 = vadd.f32 0.0, %v977
    %v979 = vpop.f32.mrb[0].mxu0
    %980 = vmatprep.mubr.f32.mxu0 %v774
    %981 = vmatmul.mubr.f32.gmra.mrb[0].mxu0 %v773
    %v982 = vpop.f32.mrb[0].mxu0
    %v983 = vadd.f32 0.0, %v982
    %v984 = vpop.f32.mrb[0].mxu0
    %985 = vmatprep.mubr.f32.mxu0 %v777
    %986 = vmatmul.mubr.f32.gmra.mrb[0].mxu0 %v776
    %v987 = vpop.f32.mrb[0].mxu0
    %v988 = vadd.f32 0.0, %v987
    %v989 = vpop.f32.mrb[0].mxu0
    %990 = vmatprep.mubr.f32.mxu0 %v780
    %991 = vmatmul.mubr.f32.gmra.mrb[0].mxu0 %v779
    %v992 = vpop.f32.mrb[0].mxu0
    %v993 = vadd.f32 0.0, %v992
    %v994 = vpop.f32.mrb[0].mxu0
    %995 = vmatprep.mubr.f32.mxu0 %v783
    %996 = vmatmul.mubr.f32.gmra.mrb[0].mxu0 %v782
    %v997 = vpop.f32.mrb[0].mxu0
    %v998 = vadd.f32 0.0, %v997
    %v999 = vpop.f32.mrb[0].mxu0
    %1000 = vmatprep.mubr.f32.mxu0 %v786
    %1001 = vmatmul.mubr.f32.gmra.mrb[0].mxu0 %v785
    %v1002 = vpop.f32.mrb[0].mxu0
    %v1003 = vadd.f32 0.0, %v1002
    %v1004 = vpop.f32.mrb[0].mxu0
    %1005 = vmatprep.mubr.f32.mxu0 %v789
    %1006 = vmatmul.mubr.f32.gmra.mrb[0].mxu0 %v788
    %v1007 = vpop.f32.mrb[0].mxu0
    %v1008 = vadd.f32 0.0, %v1007
    %v1009 = vpop.f32.mrb[0].mxu0
    %1010 = vmatprep.mubr.f32.mxu0 %v792
    %1011 = vmatmul.mubr.f32.gmra.mrb[0].mxu0 %v791
    %v1012 = vpop.f32.mrb[0].mxu0
    %v1013 = vadd.f32 0.0, %v1012
    %v1014 = vpop.f32.mrb[0].mxu0
    %1015 = vmatprep.mubr.f32.mxu0 %v795
    %1016 = vmatmul.mubr.f32.gmra.mrb[0].mxu0 %v794
    %v1017 = vpop.f32.mrb[0].mxu0
    %v1018 = vadd.f32 0.0, %v1017
    %v1019 = vpop.f32.mrb[0].mxu0
    %1020 = vmatprep.mubr.f32.mxu0 %v798
    %1021 = vmatmul.mubr.f32.gmra.mrb[0].mxu0 %v797
    %v1022 = vpop.f32.mrb[0].mxu0
    %v1023 = vadd.f32 0.0, %v1022
    %v1024 = vpop.f32.mrb[0].mxu0
    %1025 = vdwg.mxu0
    %1026 = vmatprep.subr.mxu0 0.0
    %1027 = vmatpush1.msra.mxu0 %v732
    %1028 = vmatprep.subr.mxu0 0.0
    %1029 = vmatpush1.msra.mxu0 %v733
    %1030 = vmatprep.subr.mxu0 0.0
    %1031 = vmatpush1.msra.mxu0 %v734
    %1032 = vmatprep.subr.mxu0 0.0
    %1033 = vmatpush1.msra.mxu0 %v735
    %1034 = vmatprep.subr.mxu0 0.0
    %1035 = vmatpush1.msra.mxu0 %v736
    %1036 = vmatprep.subr.mxu0 0.0
    %1037 = vmatpush1.msra.mxu0 %v737
    %1038 = vmatprep.subr.mxu0 0.0
    %1039 = vmatpush1.msra.mxu0 %v738
    %1040 = vmatprep.subr.mxu0 0.0
    %1041 = vmatpush1.msra.mxu0 %v739
    %1042 = vmatprep.subr.mxu0 0.0
    %1043 = vmatpush1.msra.mxu0 0.0
    %1044 = vmatprep.subr.mxu0 0.0
    %1045 = vmatpush1.msra.mxu0 0.0
    %1046 = vmatprep.subr.mxu0 0.0
    %1047 = vmatpush1.msra.mxu0 0.0
    %1048 = vmatprep.subr.mxu0 0.0
    %1049 = vmatpush1.msra.mxu0 0.0
    %1050 = vmatprep.subr.mxu0 0.0
    %1051 = vmatpush1.msra.mxu0 0.0
    %1052 = vmatprep.subr.mxu0 0.0
    %1053 = vmatpush1.msra.mxu0 0.0
    %1054 = vmatprep.subr.mxu0 0.0
    %1055 = vmatpush1.msra.mxu0 0.0
    %1056 = vmatprep.subr.mxu0 0.0
    %1057 = vmatpush1.msra.mxu0 0.0
    %1058 = vmatprep.subr.mxu0 0.0
    %1059 = vmatpush1.msra.mxu0 0.0
    %1060 = vmatprep.subr.mxu0 0.0
    %1061 = vmatpush1.msra.mxu0 0.0
    %1062 = vmatprep.subr.mxu0 0.0
    %1063 = vmatpush1.msra.mxu0 0.0
    %1064 = vmatprep.subr.mxu0 0.0
    %1065 = vmatpush1.msra.mxu0 0.0
    %1066 = vmatprep.subr.mxu0 0.0
    %1067 = vmatpush1.msra.mxu0 0.0
    %1068 = vmatprep.subr.mxu0 0.0
    %1069 = vmatpush1.msra.mxu0 0.0
    %1070 = vmatprep.subr.mxu0 0.0
    %1071 = vmatpush1.msra.mxu0 0.0
    %1072 = vmatprep.subr.mxu0 0.0
    %1073 = vmatpush1.msra.mxu0 0.0
    %1074 = vmatprep.subr.mxu0 0.0
    %1075 = vmatpush1.msra.mxu0 0.0
    %1076 = vmatprep.subr.mxu0 0.0
    %1077 = vmatpush1.msra.mxu0 0.0
    %1078 = vmatprep.subr.mxu0 0.0
    %1079 = vmatpush1.msra.mxu0 0.0
    %1080 = vmatprep.subr.mxu0 0.0
    %1081 = vmatpush1.msra.mxu0 0.0
    %1082 = vmatprep.subr.mxu0 0.0
    %1083 = vmatpush1.msra.mxu0 0.0
    %1084 = vmatprep.subr.mxu0 0.0
    %1085 = vmatpush1.msra.mxu0 0.0
    %1086 = vmatprep.subr.mxu0 0.0
    %1087 = vmatpush1.msra.mxu0 0.0
    %1088 = vmatprep.subr.mxu0 0.0
    %1089 = vmatpush1.msra.mxu0 0.0
    %1090 = vmatprep.mubr.f32.mxu0 0.0
    %1091 = vmatmul.mubr.f32.gmra.mrb[0].mxu0 %v802
    %v1092 = vpop.f32.mrb[0].mxu0
    %v1093 = vadd.f32 %v928, %v1092
    %v1094 = vpop.f32.mrb[0].mxu0
    %1095 = vmatprep.mubr.f32.mxu0 0.0
    %1096 = vmatmul.mubr.f32.gmra.mrb[0].mxu0 %v805
    %v1097 = vpop.f32.mrb[0].mxu0
    %v1098 = vadd.f32 %v933, %v1097
    %v1099 = vpop.f32.mrb[0].mxu0
    %1100 = vmatprep.mubr.f32.mxu0 0.0
    %1101 = vmatmul.mubr.f32.gmra.mrb[0].mxu0 %v808
    %v1102 = vpop.f32.mrb[0].mxu0
    %v1103 = vadd.f32 %v938, %v1102
    %v1104 = vpop.f32.mrb[0].mxu0
    %1105 = vmatprep.mubr.f32.mxu0 0.0
    %1106 = vmatmul.mubr.f32.gmra.mrb[0].mxu0 %v811
    %v1107 = vpop.f32.mrb[0].mxu0
    %v1108 = vadd.f32 %v943, %v1107
    %v1109 = vpop.f32.mrb[0].mxu0
    %1110 = vmatprep.mubr.f32.mxu0 0.0
    %1111 = vmatmul.mubr.f32.gmra.mrb[0].mxu0 %v814
    %v1112 = vpop.f32.mrb[0].mxu0
    %v1113 = vadd.f32 %v948, %v1112
    %v1114 = vpop.f32.mrb[0].mxu0
    %1115 = vmatprep.mubr.f32.mxu0 0.0
    %1116 = vmatmul.mubr.f32.gmra.mrb[0].mxu0 %v817
    %v1117 = vpop.f32.mrb[0].mxu0
    %v1118 = vadd.f32 %v953, %v1117
    %v1119 = vpop.f32.mrb[0].mxu0
    %1120 = vmatprep.mubr.f32.mxu0 0.0
    %1121 = vmatmul.mubr.f32.gmra.mrb[0].mxu0 %v820
    %v1122 = vpop.f32.mrb[0].mxu0
    %v1123 = vadd.f32 %v958, %v1122
    %v1124 = vpop.f32.mrb[0].mxu0
    %1125 = vmatprep.mubr.f32.mxu0 0.0
    %1126 = vmatmul.mubr.f32.gmra.mrb[0].mxu0 %v823
    %v1127 = vpop.f32.mrb[0].mxu0
    %v1128 = vadd.f32 %v963, %v1127
    %v1129 = vpop.f32.mrb[0].mxu0
    %1130 = vmatprep.mubr.f32.mxu0 0.0
    %1131 = vmatmul.mubr.f32.gmra.mrb[0].mxu0 %v826
    %v1132 = vpop.f32.mrb[0].mxu0
    %v1133 = vadd.f32 %v968, %v1132
    %v1134 = vpop.f32.mrb[0].mxu0
    %1135 = vmatprep.mubr.f32.mxu0 0.0
    %1136 = vmatmul.mubr.f32.gmra.mrb[0].mxu0 %v829
    %v1137 = vpop.f32.mrb[0].mxu0
    %v1138 = vadd.f32 %v973, %v1137
    %v1139 = vpop.f32.mrb[0].mxu0
    %1140 = vmatprep.mubr.f32.mxu0 0.0
    %1141 = vmatmul.mubr.f32.gmra.mrb[0].mxu0 %v832
    %v1142 = vpop.f32.mrb[0].mxu0
    %v1143 = vadd.f32 %v978, %v1142
    %v1144 = vpop.f32.mrb[0].mxu0
    %1145 = vmatprep.mubr.f32.mxu0 0.0
    %1146 = vmatmul.mubr.f32.gmra.mrb[0].mxu0 %v835
    %v1147 = vpop.f32.mrb[0].mxu0
    %v1148 = vadd.f32 %v983, %v1147
    %v1149 = vpop.f32.mrb[0].mxu0
    %1150 = vmatprep.mubr.f32.mxu0 0.0
    %1151 = vmatmul.mubr.f32.gmra.mrb[0].mxu0 %v838
    %v1152 = vpop.f32.mrb[0].mxu0
    %v1153 = vadd.f32 %v988, %v1152
    %v1154 = vpop.f32.mrb[0].mxu0
    %1155 = vmatprep.mubr.f32.mxu0 0.0
    %1156 = vmatmul.mubr.f32.gmra.mrb[0].mxu0 %v841
    %v1157 = vpop.f32.mrb[0].mxu0
    %v1158 = vadd.f32 %v993, %v1157
    %v1159 = vpop.f32.mrb[0].mxu0
    %1160 = vmatprep.mubr.f32.mxu0 0.0
    %1161 = vmatmul.mubr.f32.gmra.mrb[0].mxu0 %v844
    %v1162 = vpop.f32.mrb[0].mxu0
    %v1163 = vadd.f32 %v998, %v1162
    %v1164 = vpop.f32.mrb[0].mxu0
    %1165 = vmatprep.mubr.f32.mxu0 0.0
    %1166 = vmatmul.mubr.f32.gmra.mrb[0].mxu0 %v847
    %v1167 = vpop.f32.mrb[0].mxu0
    %v1168 = vadd.f32 %v1003, %v1167
    %v1169 = vpop.f32.mrb[0].mxu0
    %1170 = vmatprep.mubr.f32.mxu0 0.0
    %1171 = vmatmul.mubr.f32.gmra.mrb[0].mxu0 %v850
    %v1172 = vpop.f32.mrb[0].mxu0
    %v1173 = vadd.f32 %v1008, %v1172
    %v1174 = vpop.f32.mrb[0].mxu0
    %1175 = vmatprep.mubr.f32.mxu0 0.0
    %1176 = vmatmul.mubr.f32.gmra.mrb[0].mxu0 %v853
    %v1177 = vpop.f32.mrb[0].mxu0
    %v1178 = vadd.f32 %v1013, %v1177
    %v1179 = vpop.f32.mrb[0].mxu0
    %1180 = vmatprep.mubr.f32.mxu0 0.0
    %1181 = vmatmul.mubr.f32.gmra.mrb[0].mxu0 %v856
    %v1182 = vpop.f32.mrb[0].mxu0
    %v1183 = vadd.f32 %v1018, %v1182
    %v1184 = vpop.f32.mrb[0].mxu0
    %1185 = vmatprep.mubr.f32.mxu0 0.0
    %1186 = vmatmul.mubr.f32.gmra.mrb[0].mxu0 %v859
    %v1187 = vpop.f32.mrb[0].mxu0
    %v1188 = vadd.f32 %v1023, %v1187
    %v1189 = vpop.f32.mrb[0].mxu0
    %1190 = vdwg.mxu0
    %v1191 = vld [vmem:[%s4] sm:$0xff]
    %v1192 = vld [vmem:[%s4 + $0x8] sm:$0xff]
    %v1193 = vld [vmem:[%s4 + $0x10] sm:$0xff]
    %v1194 = vld [vmem:[%s4 + $0x18] sm:$0xff]
    %1196 = vset.pattern.permute.xlu0 0
    %1197 = vperm.xlu0 %1196, %v1191
    %v1198 = vpop.permute.xlu0 %1197
    %1201 = vset.pattern.permute.xlu0 0
    %1202 = vperm.xlu0 %1201, %v1192
    %v1203 = vpop.permute.xlu0 %1202
    %1206 = vset.pattern.permute.xlu0 0
    %1207 = vperm.xlu0 %1206, %v1193
    %v1208 = vpop.permute.xlu0 %1207
    %1211 = vset.pattern.permute.xlu0 0
    %1212 = vperm.xlu0 %1211, %v1194
    %v1213 = vpop.permute.xlu0 %1212
    %v1215 = vadd.f32 %v1173, %v1198
    %v1216 = vadd.f32 %v1178, %v1203
    %v1217 = vadd.f32 %v1183, %v1208
    %v1218 = vadd.f32 %v1188, %v1213
    %v1219 = vand.u32 2147483647, %v1215
    %v1220 = vand.u32 2147483647, %v1216
    %v1221 = vand.u32 2147483647, %v1217
    %v1222 = vand.u32 2147483647, %v1218
    %v1223 = vld [vmem:[%s5] sm:$0xff]
    %v1224 = vld [vmem:[%s5 + $0x8] sm:$0xff]
    %v1225 = vld [vmem:[%s5 + $0x10] sm:$0xff]
    %v1226 = vld [vmem:[%s5 + $0x18] sm:$0xff]
    %v1227 = vmul.f32 %v30, %v1093
    %v1228 = vmul.f32 %v31, %v1098
    %v1229 = vmul.f32 %v32, %v1103
    %v1230 = vmul.f32 %v33, %v1108
    %v1231 = vmul.f32 %v30, %v1113
    %v1232 = vmul.f32 %v31, %v1118
    %v1233 = vmul.f32 %v32, %v1123
    %v1234 = vmul.f32 %v33, %v1128
    %v1235 = vmul.f32 %v30, %v1133
    %v1236 = vmul.f32 %v31, %v1138
    %v1237 = vmul.f32 %v32, %v1143
    %v1238 = vmul.f32 %v33, %v1148
    %v1239 = vmul.f32 %v30, %v1153
    %v1240 = vmul.f32 %v31, %v1158
    %v1241 = vmul.f32 %v32, %v1163
    %v1242 = vmul.f32 %v33, %v1168
    %1243 = vmatprep.subr.mxu0 0.0
    %1244 = vmatpush1.msra.mxu0 %v1227
    %1245 = vmatprep.subr.mxu0 0.0
    %1246 = vmatpush1.msra.mxu0 %v1228
    %1247 = vmatprep.subr.mxu0 0.0
    %1248 = vmatpush1.msra.mxu0 %v1229
    %1249 = vmatprep.subr.mxu0 0.0
    %1250 = vmatpush1.msra.mxu0 %v1230
    %1251 = vmatprep.subr.mxu0 0.0
    %1252 = vmatpush1.msra.mxu0 %v1231
    %1253 = vmatprep.subr.mxu0 0.0
    %1254 = vmatpush1.msra.mxu0 %v1232
    %1255 = vmatprep.subr.mxu0 0.0
    %1256 = vmatpush1.msra.mxu0 %v1233
    %1257 = vmatprep.subr.mxu0 0.0
    %1258 = vmatpush1.msra.mxu0 %v1234
    %1259 = vmatprep.subr.mxu0 0.0
    %1260 = vmatpush1.msra.mxu0 %v1235
    %1261 = vmatprep.subr.mxu0 0.0
    %1262 = vmatpush1.msra.mxu0 %v1236
    %1263 = vmatprep.subr.mxu0 0.0
    %1264 = vmatpush1.msra.mxu0 %v1237
    %1265 = vmatprep.subr.mxu0 0.0
    %1266 = vmatpush1.msra.mxu0 %v1238
    %1267 = vmatprep.subr.mxu0 0.0
    %1268 = vmatpush1.msra.mxu0 %v1239
    %1269 = vmatprep.subr.mxu0 0.0
    %1270 = vmatpush1.msra.mxu0 %v1240
    %1271 = vmatprep.subr.mxu0 0.0
    %1272 = vmatpush1.msra.mxu0 %v1241
    %1273 = vmatprep.subr.mxu0 0.0
    %1274 = vmatpush1.msra.mxu0 %v1242
    %1275 = vmatprep.subr.mxu0 0.0
    %1276 = vmatpush1.msra.mxu0 0.0
    %1277 = vmatprep.subr.mxu0 0.0
    %1278 = vmatpush1.msra.mxu0 0.0
    %1279 = vmatprep.subr.mxu0 0.0
    %1280 = vmatpush1.msra.mxu0 0.0
    %1281 = vmatprep.subr.mxu0 0.0
    %1282 = vmatpush1.msra.mxu0 0.0
    %1283 = vmatprep.subr.mxu0 0.0
    %1284 = vmatpush1.msra.mxu0 0.0
    %1285 = vmatprep.subr.mxu0 0.0
    %1286 = vmatpush1.msra.mxu0 0.0
    %1287 = vmatprep.subr.mxu0 0.0
    %1288 = vmatpush1.msra.mxu0 0.0
    %1289 = vmatprep.subr.mxu0 0.0
    %1290 = vmatpush1.msra.mxu0 0.0
    %1291 = vmatprep.subr.mxu0 0.0
    %1292 = vmatpush1.msra.mxu0 0.0
    %1293 = vmatprep.subr.mxu0 0.0
    %1294 = vmatpush1.msra.mxu0 0.0
    %1295 = vmatprep.subr.mxu0 0.0
    %1296 = vmatpush1.msra.mxu0 0.0
    %1297 = vmatprep.subr.mxu0 0.0
    %1298 = vmatpush1.msra.mxu0 0.0
    %1299 = vmatprep.subr.mxu0 0.0
    %1300 = vmatpush1.msra.mxu0 0.0
    %1301 = vmatprep.subr.mxu0 0.0
    %1302 = vmatpush1.msra.mxu0 0.0
    %1303 = vmatprep.subr.mxu0 0.0
    %1304 = vmatpush1.msra.mxu0 0.0
    %1305 = vmatprep.subr.mxu0 0.0
    %1306 = vmatpush1.msra.mxu0 0.0
    %1307 = vmatprep.mubr.f32.mxu0 0.0
    %1308 = vmatmul.mubr.f32.gmra.mrb[0].mxu0 %v1223
    %v1309 = vpop.f32.mrb[0].mxu0
    %v1310 = vadd.f32 0.0, %v1309
    %v1311 = vpop.f32.mrb[0].mxu0
    %1312 = vmatprep.mubr.f32.mxu0 0.0
    %1313 = vmatmul.mubr.f32.gmra.mrb[0].mxu0 %v1224
    %v1314 = vpop.f32.mrb[0].mxu0
    %v1315 = vadd.f32 0.0, %v1314
    %v1316 = vpop.f32.mrb[0].mxu0
    %1317 = vmatprep.mubr.f32.mxu0 0.0
    %1318 = vmatmul.mubr.f32.gmra.mrb[0].mxu0 %v1225
    %v1319 = vpop.f32.mrb[0].mxu0
    %v1320 = vadd.f32 0.0, %v1319
    %v1321 = vpop.f32.mrb[0].mxu0
    %1322 = vmatprep.mubr.f32.mxu0 0.0
    %1323 = vmatmul.mubr.f32.gmra.mrb[0].mxu0 %v1226
    %v1324 = vpop.f32.mrb[0].mxu0
    %v1325 = vadd.f32 0.0, %v1324
    %v1326 = vpop.f32.mrb[0].mxu0
    %1327 = vdwg.mxu0
    %v1328 = vmax.f32 %v1310, %v1315
    %v1329 = vmax.f32 %v1320, %v1325
    %v1330 = vmax.f32 %v1328, %v1329
    %v1331 = vrot.slane %v1330, 4
    %v1332 = vmax.f32 %v1330, %v1331
    %v1333 = vrot.slane %v1332, 2
    %v1334 = vmax.f32 %v1332, %v1333
    %v1335 = vrot.slane %v1334, 1
    %v1336 = vmax.f32 %v1334, %v1335
    %v1337 = vsub.f32 %v1310, %v1336
    %v1338 = vsub.f32 %v1315, %v1336
    %v1339 = vsub.f32 %v1320, %v1336
    %v1340 = vsub.f32 %v1325, %v1336
    %v1341 = vmul.f32 %v1337, 1.442695
    %v1342 = vpow.pop %v1341
    %v1343 = vmul.f32 %v1338, 1.442695
    %v1344 = vpow.pop %v1343
    %v1345 = vmul.f32 %v1339, 1.442695
    %v1346 = vpow.pop %v1345
    %v1347 = vmul.f32 %v1340, 1.442695
    %v1348 = vpow.pop %v1347
    %v1349 = vld [vmem:[%s6] sm:$0xff]
    %v1350 = vld [vmem:[%s6 + $0x8] sm:$0xff]
    %v1351 = vld [vmem:[%s6 + $0x10] sm:$0xff]
    %v1352 = vld [vmem:[%s6 + $0x18] sm:$0xff]
    %v1354 = vsel %vm314, %v1349, 0
    %v1357 = vsel %vm314, %v1350, 0
    %v1360 = vsel %vm314, %v1351, 0
    %v1363 = vsel %vm314, %v1352, 0
    %1365 = vmatprep.subr.mxu0 0.0
    %1366 = vmatpush1.msra.mxu0 %v1342
    %1367 = vmatprep.subr.mxu0 0.0
    %1368 = vmatpush1.msra.mxu0 %v1344
    %1369 = vmatprep.subr.mxu0 0.0
    %1370 = vmatpush1.msra.mxu0 %v1346
    %1371 = vmatprep.subr.mxu0 0.0
    %1372 = vmatpush1.msra.mxu0 %v1348
    %1373 = vmatprep.subr.mxu0 0.0
    %1374 = vmatpush1.msra.mxu0 0.0
    %1375 = vmatprep.subr.mxu0 0.0
    %1376 = vmatpush1.msra.mxu0 0.0
    %1377 = vmatprep.subr.mxu0 0.0
    %1378 = vmatpush1.msra.mxu0 0.0
    %1379 = vmatprep.subr.mxu0 0.0
    %1380 = vmatpush1.msra.mxu0 0.0
    %1381 = vmatprep.subr.mxu0 0.0
    %1382 = vmatpush1.msra.mxu0 0.0
    %1383 = vmatprep.subr.mxu0 0.0
    %1384 = vmatpush1.msra.mxu0 0.0
    %1385 = vmatprep.subr.mxu0 0.0
    %1386 = vmatpush1.msra.mxu0 0.0
    %1387 = vmatprep.subr.mxu0 0.0
    %1388 = vmatpush1.msra.mxu0 0.0
    %1389 = vmatprep.subr.mxu0 0.0
    %1390 = vmatpush1.msra.mxu0 0.0
    %1391 = vmatprep.subr.mxu0 0.0
    %1392 = vmatpush1.msra.mxu0 0.0
    %1393 = vmatprep.subr.mxu0 0.0
    %1394 = vmatpush1.msra.mxu0 0.0
    %1395 = vmatprep.subr.mxu0 0.0
    %1396 = vmatpush1.msra.mxu0 0.0
    %1397 = vmatprep.subr.mxu0 0.0
    %1398 = vmatpush1.msra.mxu0 0.0
    %1399 = vmatprep.subr.mxu0 0.0
    %1400 = vmatpush1.msra.mxu0 0.0
    %1401 = vmatprep.subr.mxu0 0.0
    %1402 = vmatpush1.msra.mxu0 0.0
    %1403 = vmatprep.subr.mxu0 0.0
    %1404 = vmatpush1.msra.mxu0 0.0
    %1405 = vmatprep.subr.mxu0 0.0
    %1406 = vmatpush1.msra.mxu0 0.0
    %1407 = vmatprep.subr.mxu0 0.0
    %1408 = vmatpush1.msra.mxu0 0.0
    %1409 = vmatprep.subr.mxu0 0.0
    %1410 = vmatpush1.msra.mxu0 0.0
    %1411 = vmatprep.subr.mxu0 0.0
    %1412 = vmatpush1.msra.mxu0 0.0
    %1413 = vmatprep.subr.mxu0 0.0
    %1414 = vmatpush1.msra.mxu0 0.0
    %1415 = vmatprep.subr.mxu0 0.0
    %1416 = vmatpush1.msra.mxu0 0.0
    %1417 = vmatprep.subr.mxu0 0.0
    %1418 = vmatpush1.msra.mxu0 0.0
    %1419 = vmatprep.subr.mxu0 0.0
    %1420 = vmatpush1.msra.mxu0 0.0
    %1421 = vmatprep.subr.mxu0 0.0
    %1422 = vmatpush1.msra.mxu0 0.0
    %1423 = vmatprep.subr.mxu0 0.0
    %1424 = vmatpush1.msra.mxu0 0.0
    %1425 = vmatprep.subr.mxu0 0.0
    %1426 = vmatpush1.msra.mxu0 0.0
    %1427 = vmatprep.subr.mxu0 0.0
    %1428 = vmatpush1.msra.mxu0 0.0
    %1429 = vmatprep.mubr.f32.mxu0 0.0
    %1430 = vmatmul.mubr.f32.gmra.mrb[0].mxu0 %v1354
    %v1431 = vpop.f32.mrb[0].mxu0
    %v1432 = vadd.f32 0.0, %v1431
    %v1433 = vpop.f32.mrb[0].mxu0
    %1434 = vmatprep.mubr.f32.mxu0 0.0
    %1435 = vmatmul.mubr.f32.gmra.mrb[0].mxu0 %v1357
    %v1436 = vpop.f32.mrb[0].mxu0
    %v1437 = vadd.f32 0.0, %v1436
    %v1438 = vpop.f32.mrb[0].mxu0
    %1439 = vmatprep.mubr.f32.mxu0 0.0
    %1440 = vmatmul.mubr.f32.gmra.mrb[0].mxu0 %v1360
    %v1441 = vpop.f32.mrb[0].mxu0
    %v1442 = vadd.f32 0.0, %v1441
    %v1443 = vpop.f32.mrb[0].mxu0
    %1444 = vmatprep.mubr.f32.mxu0 0.0
    %1445 = vmatmul.mubr.f32.gmra.mrb[0].mxu0 %v1363
    %v1446 = vpop.f32.mrb[0].mxu0
    %v1447 = vadd.f32 0.0, %v1446
    %v1448 = vpop.f32.mrb[0].mxu0
    %1449 = vdwg.mxu0
    %v1450 = vrcp.pop %v1432
    %v1451 = vrcp.pop %v1437
    %v1452 = vrcp.pop %v1442
    %v1453 = vrcp.pop %v1447
    %v1454 = vmul.f32 %v1432, %v1450
    %v1455 = vmul.f32 %v1437, %v1451
    %v1456 = vmul.f32 %v1442, %v1452
    %v1457 = vmul.f32 %v1447, %v1453
    %v1458 = vsub.f32 2.0, %v1454
    %v1459 = vsub.f32 2.0, %v1455
    %v1460 = vsub.f32 2.0, %v1456
    %v1461 = vsub.f32 2.0, %v1457
    %v1462 = vmul.f32 %v1450, %v1458
    %v1463 = vmul.f32 %v1451, %v1459
    %v1464 = vmul.f32 %v1452, %v1460
    %v1465 = vmul.f32 %v1453, %v1461
    %v1466 = vmul.f32 %v1342, %v1462
    %v1467 = vmul.f32 %v1344, %v1463
    %v1468 = vmul.f32 %v1346, %v1464
    %v1469 = vmul.f32 %v1348, %v1465
    %v1470 = vmul.f32 %v1466, %v1219
    %v1471 = vmul.f32 %v1467, %v1220
    %v1472 = vmul.f32 %v1468, %v1221
    %v1473 = vmul.f32 %v1469, %v1222
    %v1474 = vmul.f32 %v1310, %v1310
    %v1475 = vmul.f32 %v1315, %v1315
    %v1476 = vmul.f32 %v1320, %v1320
    %v1477 = vmul.f32 %v1325, %v1325
    %v1478 = vadd.f32 %v1466, 1e-08
    %v1479 = vadd.f32 %v1467, 1e-08
    %v1480 = vadd.f32 %v1468, 1e-08
    %v1481 = vadd.f32 %v1469, 1e-08
    %v1482 = vlog2.pop %v1478
    %v1483 = vmul.f32 %v1482, 0.6931472
    %v1484 = vlog2.pop %v1479
    %v1485 = vmul.f32 %v1484, 0.6931472
    %v1486 = vlog2.pop %v1480
    %v1487 = vmul.f32 %v1486, 0.6931472
    %v1488 = vlog2.pop %v1481
    %v1489 = vmul.f32 %v1488, 0.6931472
    %v1490 = vsub.f32 0.0, %v1483
    %v1491 = vsub.f32 0.0, %v1485
    %v1492 = vsub.f32 0.0, %v1487
    %v1493 = vsub.f32 0.0, %v1489
    %v1494 = vmul.f32 %v1490, %v1466
    %v1495 = vmul.f32 %v1491, %v1467
    %v1496 = vmul.f32 %v1492, %v1468
    %v1497 = vmul.f32 %v1493, %v1469
    %v1498 = vld [vmem:[%s7] sm:$0xff]
    %v1499 = vld [vmem:[%s7 + $0x8] sm:$0xff]
    %vm1500 = vcmask 785408
    %v1502 = vsel %vm1500, %v1498, 0
    %v1505 = vsel %vm1500, %v1499, 0
    %1507 = vmatprep.subr.mxu0 0.0
    %1508 = vmatpush1.msra.mxu0 %v1470
    %1509 = vmatprep.subr.mxu0 0.0
    %1510 = vmatpush1.msra.mxu0 %v1471
    %1511 = vmatprep.subr.mxu0 0.0
    %1512 = vmatpush1.msra.mxu0 %v1472
    %1513 = vmatprep.subr.mxu0 0.0
    %1514 = vmatpush1.msra.mxu0 %v1473
    %1515 = vmatprep.subr.mxu0 0.0
    %1516 = vmatpush1.msra.mxu0 %v1474
    %1517 = vmatprep.subr.mxu0 0.0
    %1518 = vmatpush1.msra.mxu0 %v1475
    %1519 = vmatprep.subr.mxu0 0.0
    %1520 = vmatpush1.msra.mxu0 %v1476
    %1521 = vmatprep.subr.mxu0 0.0
    %1522 = vmatpush1.msra.mxu0 %v1477
    %1523 = vmatprep.subr.mxu0 0.0
    %1524 = vmatpush1.msra.mxu0 %v1494
    %1525 = vmatprep.subr.mxu0 0.0
    %1526 = vmatpush1.msra.mxu0 %v1495
    %1527 = vmatprep.subr.mxu0 0.0
    %1528 = vmatpush1.msra.mxu0 %v1496
    %1529 = vmatprep.subr.mxu0 0.0
    %1530 = vmatpush1.msra.mxu0 %v1497
    %1531 = vmatprep.subr.mxu0 0.0
    %1532 = vmatpush1.msra.mxu0 0.0
    %1533 = vmatprep.subr.mxu0 0.0
    %1534 = vmatpush1.msra.mxu0 0.0
    %1535 = vmatprep.subr.mxu0 0.0
    %1536 = vmatpush1.msra.mxu0 0.0
    %1537 = vmatprep.subr.mxu0 0.0
    %1538 = vmatpush1.msra.mxu0 0.0
    %1539 = vmatprep.subr.mxu0 0.0
    %1540 = vmatpush1.msra.mxu0 0.0
    %1541 = vmatprep.subr.mxu0 0.0
    %1542 = vmatpush1.msra.mxu0 0.0
    %1543 = vmatprep.subr.mxu0 0.0
    %1544 = vmatpush1.msra.mxu0 0.0
    %1545 = vmatprep.subr.mxu0 0.0
    %1546 = vmatpush1.msra.mxu0 0.0
    %1547 = vmatprep.subr.mxu0 0.0
    %1548 = vmatpush1.msra.mxu0 0.0
    %1549 = vmatprep.subr.mxu0 0.0
    %1550 = vmatpush1.msra.mxu0 0.0
    %1551 = vmatprep.subr.mxu0 0.0
    %1552 = vmatpush1.msra.mxu0 0.0
    %1553 = vmatprep.subr.mxu0 0.0
    %1554 = vmatpush1.msra.mxu0 0.0
    %1555 = vmatprep.subr.mxu0 0.0
    %1556 = vmatpush1.msra.mxu0 0.0
    %1557 = vmatprep.subr.mxu0 0.0
    %1558 = vmatpush1.msra.mxu0 0.0
    %1559 = vmatprep.subr.mxu0 0.0
    %1560 = vmatpush1.msra.mxu0 0.0
    %1561 = vmatprep.subr.mxu0 0.0
    %1562 = vmatpush1.msra.mxu0 0.0
    %1563 = vmatprep.subr.mxu0 0.0
    %1564 = vmatpush1.msra.mxu0 0.0
    %1565 = vmatprep.subr.mxu0 0.0
    %1566 = vmatpush1.msra.mxu0 0.0
    %1567 = vmatprep.subr.mxu0 0.0
    %1568 = vmatpush1.msra.mxu0 0.0
    %1569 = vmatprep.subr.mxu0 0.0
    %1570 = vmatpush1.msra.mxu0 0.0
    %1571 = vmatprep.mubr.f32.mxu0 0.0
    %1572 = vmatmul.mubr.f32.gmra.mrb[0].mxu0 %v1502
    %v1573 = vpop.f32.mrb[0].mxu0
    %v1574 = vadd.f32 0.0, %v1573
    %v1575 = vpop.f32.mrb[0].mxu0
    %1576 = vmatprep.mubr.f32.mxu0 0.0
    %1577 = vmatmul.mubr.f32.gmra.mrb[0].mxu0 %v1505
    %v1578 = vpop.f32.mrb[0].mxu0
    %v1579 = vadd.f32 0.0, %v1578
    %v1580 = vpop.f32.mrb[0].mxu0
    %1581 = vdwg.mxu0
    %1582 = vst [vmem:[#allocation2] sm:$0xff] %v1574
    %1583 = vst [vmem:[#allocation2 + $0x8] sm:$0xff] %v1579
    // Predicated region
    $region34: #{tpu_custom_call.1} parent=1 // pred_check
      _
    $region35: #{tpu_custom_call.1} parent=1 // pred_check_branch
      %1585 = sbr.rel (0) target = $region37
    $region36: #{tpu_custom_call.1} parent=1 // pred_region
      %s1587 = ssub.s32 256, 256
      %1588 = vsyncadd [#allocation3], %s1587
      %s1589 = sshll.u32 [#allocation2], 4
      %s1590 = int_to_ptr.vmem [resolvable:$true] %s1589
      %1595 = dma.vmem_to_hbm [thread:$0]  %s1590, 256, %s8, [#allocation3], 128, 128, 8
    $region37: #{tpu_custom_call.1} parent=1 // pred_fallthru
      _
    // Predicated region
    $region38: #{tpu_custom_call.1} parent=1 // pred_check
      _
    $region39: #{tpu_custom_call.1} parent=1 // pred_check_branch
      %1597 = sbr.rel (0) target = $region41
    $region40: #{tpu_custom_call.1} parent=1 // pred_region
      %1598 = dma.done [#allocation3], 256
    $region41: #{tpu_custom_call.1} parent=1 // pred_fallthru
      _
    %1599 = vsyncpa [#allocation3], 1

</llo_original>
